<compile_context>
chip_gen: v7x
topology: tpu7x:2x2x1
jax: 0.10.0
libtpu: 0.0.40
codegen_flags: <defaults>
</compile_context>

<pallas_src>
import functools

import jax
import jax.numpy as jnp
from jax.experimental import pallas as pl
from jax.experimental.pallas import tpu as pltpu

EPS = 1e-5
LANE = 128
_MIB = 1 << 20


def _round_up(x, m):
    return ((x + m - 1) // m) * m


def _bn_relu(h, inv_b):
    # BatchNorm1d in training mode: biased batch variance, eps=1e-5,
    # gamma=1 / beta=0 (as set by init_weights), followed by ReLU.
    # Shifted two-pass variance in f32 for numerical stability.
    mean = jnp.sum(h, axis=0, keepdims=True) * inv_b
    hc = h - mean
    var = jnp.sum(hc * hc, axis=0, keepdims=True) * inv_b
    return jnp.maximum(hc * jax.lax.rsqrt(var + EPS), 0.0)


def _flow_kernel(inv_b, unroll,
                 x_ref, w0_ref, wf_ref, bf_ref, w1_ref, w2_ref,
                 out_ref, h_ref):
    i = pl.program_id(0)

    # Input Linear only on the first grid step; h persists in VMEM scratch.
    # (Internal Linear biases are zero per init_weights and would in any case
    #  be cancelled by the training-mode BatchNorm mean subtraction.)
    @pl.when(i == 0)
    def _():
        x16 = x_ref[...].astype(jnp.bfloat16)
        h_ref[...] = jnp.dot(x16, w0_ref[...],
                             preferred_element_type=jnp.float32)

    # `unroll` residual blocks per grid step.  h is read once / written once
    # per step; the K-block loop is fully unrolled at trace time.
    h = h_ref[...]
    for k in range(unroll):
        r = _bn_relu(h, inv_b)
        r = jnp.dot(r.astype(jnp.bfloat16), w1_ref[k],
                    preferred_element_type=jnp.float32)
        r = _bn_relu(r, inv_b)
        r = jnp.dot(r.astype(jnp.bfloat16), w2_ref[k],
                    preferred_element_type=jnp.float32)
        h = r + h
    h_ref[...] = h

    # Final BN -> ReLU -> Linear on the last step; lane-dense padded output.
    @pl.when(i == pl.num_programs(0) - 1)
    def _():
        hf = _bn_relu(h_ref[...], inv_b)
        out_ref[...] = (jnp.dot(hf.astype(jnp.bfloat16), wf_ref[...],
                                preferred_element_type=jnp.float32)
                        + bf_ref[...]).astype(out_ref.dtype)


def resnet_flow_forward(x, params, n_blocks, *, block_unroll=None,
                        vmem_budget_bytes=40 * _MIB):
    """x: [B, input_size] f32.  params: dict of stacked weights (init_params)."""
    B, input_size = x.shape
    hidden = params["w0"].shape[1]
    output_size = params["wf"].shape[1]

    assert n_blocks >= 1, "need at least one residual block"
    assert B % 8 == 0, "batch should be a multiple of 8 (sublane packing)"
    assert hidden % LANE == 0, "hidden_size should be a multiple of 128 lanes"
    assert params["w1s"].shape == (n_blocks, hidden, hidden)
    assert params["w2s"].shape == (n_blocks, hidden, hidden)

    # Lane-dense padding of the contraction (input) and output feature dims:
    # zero columns of x / zero rows of w0 leave the first matmul exact; padded
    # output columns are zero and sliced off after the call.
    in_pad = _round_up(input_size, LANE)
    out_pad = _round_up(output_size, LANE)
    xp = jnp.pad(x, ((0, 0), (0, in_pad - input_size)))
    w0 = jnp.pad(params["w0"], ((0, in_pad - input_size), (0, 0)))
    wf = jnp.pad(params["wf"], ((0, 0), (0, out_pad - output_size)))
    bf = jnp.pad(params["bf"], ((0, 0), (0, out_pad - output_size)))

    # VMEM accounting: grid-invariant operands and the output are
    # double-buffered by the BlockSpec pipeline; the h scratch is single.
    fixed_bytes = (B * hidden * 4                     # resident h (f32)
                   + 2 * B * in_pad * 4               # x (f32)
                   + 2 * in_pad * hidden * 2          # w0 (bf16)
                   + 2 * hidden * out_pad * 2         # wf (bf16)
                   + 2 * out_pad * 4                  # bf (f32)
                   + 2 * B * out_pad * 4)             # out (f32)
    per_block_bytes = 2 * hidden * hidden * 2         # two bf16 h x h matrices

    if block_unroll is None:
        block_unroll = 1
        for k in range(1, n_blocks + 1):
            if (n_blocks % k == 0
                    and fixed_bytes + 2 * k * per_block_bytes <= vmem_budget_bytes):
                block_unroll = k
    assert n_blocks % block_unroll == 0
    n_steps = n_blocks // block_unroll

    est_bytes = fixed_bytes + 2 * block_unroll * per_block_bytes
    vmem_limit = int(min(max(2 * est_bytes, 32 * _MIB), 48 * _MIB))

    kernel = functools.partial(_flow_kernel, 1.0 / B, block_unroll)

    grid_spec = pltpu.PrefetchScalarGridSpec(
        num_scalar_prefetch=0,
        grid=(n_steps,),
        in_specs=[
            pl.BlockSpec((B, in_pad), lambda i: (0, 0)),              # x
            pl.BlockSpec((in_pad, hidden), lambda i: (0, 0)),         # w0
            pl.BlockSpec((hidden, out_pad), lambda i: (0, 0)),        # wf
            pl.BlockSpec((1, out_pad), lambda i: (0, 0)),             # bf
            pl.BlockSpec((block_unroll, hidden, hidden),
                         lambda i: (i, 0, 0)),                        # w1s tile
            pl.BlockSpec((block_unroll, hidden, hidden),
                         lambda i: (i, 0, 0)),                        # w2s tile
        ],
        out_specs=pl.BlockSpec((B, out_pad), lambda i: (0, 0)),
        scratch_shapes=[pltpu.VMEM((B, hidden), jnp.float32)],        # resident h
    )

    flops = (2 * B * in_pad * hidden
             + n_blocks * 2 * (2 * B * hidden * hidden)
             + 2 * B * hidden * out_pad)
    transcendentals = (2 * n_blocks + 1) * hidden       # one rsqrt row per BN
    bytes_accessed = (xp.size * 4
                      + 2 * (w0.size + params["w1s"].size
                             + params["w2s"].size + wf.size)   # bf16 weights
                      + 4 * bf.size
                      + B * out_pad * 4)

    out_padded = pl.pallas_call(
        kernel,
        out_shape=jax.ShapeDtypeStruct((B, out_pad), jnp.float32),
        grid_spec=grid_spec,
        compiler_params=pltpu.CompilerParams(
            dimension_semantics=("arbitrary",),   # block axis carries h sequentially
            vmem_limit_bytes=vmem_limit),
        cost_estimate=pl.CostEstimate(
            flops=flops,
            transcendentals=transcendentals,
            bytes_accessed=bytes_accessed),
    )(xp, w0, wf, bf, params["w1s"], params["w2s"])

    return out_padded[:, :output_size]


def init_params(key, input_size, n_blocks, hidden_size, output_size):
    """Kaiming-normal Linear weights (std=sqrt(2/fan_in)), zero biases,
    BN gamma=1 / beta=0 (implicit in the kernel).  Weights stored [in, out]
    in bf16 (HBM bandwidth); only the output bias is kept (internal biases
    are zero and cancelled by training-mode BN)."""
    ks = jax.random.split(key, 2 + 2 * n_blocks)

    def kaiming(k, fan_in, fan_out):
        w = (jax.random.normal(k, (fan_in, fan_out), jnp.float32)
             * jnp.sqrt(2.0 / fan_in))
        return w.astype(jnp.bfloat16)

    w0 = kaiming(ks[0], input_size, hidden_size)
    w1s = jnp.stack([kaiming(ks[1 + 2 * i], hidden_size, hidden_size)
                     for i in range(n_blocks)])          # [n_blocks, h, h] bf16
    w2s = jnp.stack([kaiming(ks[2 + 2 * i], hidden_size, hidden_size)
                     for i in range(n_blocks)])          # [n_blocks, h, h] bf16
    wf = kaiming(ks[-1], hidden_size, output_size)
    bf = jnp.zeros((1, output_size), jnp.float32)
    return dict(w0=w0, w1s=w1s, w2s=w2s, wf=wf, bf=bf)


def reference_forward(x, params, n_blocks):
    """Pure-JAX f32 reference with the PyTorch module's semantics
    (training-mode BN, biased variance); bf16-stored weights upcast to f32."""
    def bn_relu(h):
        mean = jnp.mean(h, axis=0, keepdims=True)
        var = jnp.mean((h - mean) ** 2, axis=0, keepdims=True)
        return jnp.maximum((h - mean) * jax.lax.rsqrt(var + EPS), 0.0)

    h = x @ params["w0"].astype(jnp.float32)
    for i in range(n_blocks):
        sc = h
        r = bn_relu(h)
        r = r @ params["w1s"][i].astype(jnp.float32)
        r = bn_relu(r)
        r = r @ params["w2s"][i].astype(jnp.float32)
        h = r + sc
    h = bn_relu(h)
    return h @ params["wf"].astype(jnp.float32) + params["bf"]


if __name__ == "__main__":
    # Small shapes consistent with the module's forward (x is [batch, input]);
    # batch chosen as a multiple of 16 (bf16 sublane packing for the MXU LHS).
    batch, input_size, n_blocks, hidden_size, output_size = 16, 16, 4, 128, 4

    key = jax.random.PRNGKey(0)
    kx, kp = jax.random.split(key)
    x = jax.random.normal(kx, (batch, input_size), jnp.float32)
    params = init_params(kp, input_size, n_blocks, hidden_size, output_size)

    ref = reference_forward(x, params, n_blocks)

    # (a) auto unroll: all 4 blocks' weights resident, single grid step.
    out_resident = jax.block_until_ready(
        resnet_flow_forward(x, params, n_blocks))
    # (b) forced unroll=2: exercises the streamed / double-buffered path.
    out_streamed = jax.block_until_ready(
        resnet_flow_forward(x, params, n_blocks, block_unroll=2))

    for out in (out_resident, out_streamed):
        assert out.shape == (batch, output_size)
        # bf16 MXU operands with f32 accumulation -> a few 1e-3 relative error.
        assert jnp.allclose(out, ref, atol=2e-2, rtol=2e-2), (
            f"max abs diff {jnp.max(jnp.abs(out - ref))}")

    print("KERNEL_OK")
</pallas_src>

<mosaic_0001>
module attributes {stable_mosaic.version = 11 : i64} {
  func.func @_flow_kernel(%arg0: i32, %arg1: memref<16x128xf32, #tpu.memory_space<vmem>>, %arg2: memref<128x128xbf16, #tpu.memory_space<vmem>>, %arg3: memref<128x128xbf16, #tpu.memory_space<vmem>>, %arg4: memref<1x128xf32, #tpu.memory_space<vmem>>, %arg5: memref<4x128x128xbf16, #tpu.memory_space<vmem>>, %arg6: memref<4x128x128xbf16, #tpu.memory_space<vmem>>, %arg7: memref<16x128xf32, #tpu.memory_space<vmem>>, %arg8: memref<16x128xf32, #tpu.memory_space<vmem>>) attributes {dimension_semantics = [#tpu.dimension_semantics<arbitrary>], iteration_bounds = array<i64: 1>, scalar_prefetch = 0 : i64, scratch_operands = 1 : i64, tpu.core_type = #tpu.core_type<tc>, window_params = [{pipeline_mode = #tpu.pipeline_mode<synchronous>, transform_indices = @transform_0, window_bounds = array<i64: 16, 128>}, {pipeline_mode = #tpu.pipeline_mode<synchronous>, transform_indices = @transform_1, window_bounds = array<i64: 128, 128>}, {pipeline_mode = #tpu.pipeline_mode<synchronous>, transform_indices = @transform_2, window_bounds = array<i64: 128, 128>}, {pipeline_mode = #tpu.pipeline_mode<synchronous>, transform_indices = @transform_3, window_bounds = array<i64: 1, 128>}, {transform_indices = @transform_4, window_bounds = array<i64: 4, 128, 128>}, {transform_indices = @transform_5, window_bounds = array<i64: 4, 128, 128>}, {pipeline_mode = #tpu.pipeline_mode<synchronous>, transform_indices = @transform_6, window_bounds = array<i64: 16, 128>}]} {
    %c0_i32 = arith.constant 0 : i32
    %0 = arith.cmpi eq, %arg0, %c0_i32 : i32
    %1 = arith.extui %0 : i1 to i32
    %c0_i32_0 = arith.constant 0 : i32
    %2 = arith.cmpi ne, %1, %c0_i32_0 : i32
    scf.if %2 {
      %c0_82 = arith.constant 0 : index
      %c0_83 = arith.constant 0 : index
      %188 = vector.load %arg1[%c0_82, %c0_83] : memref<16x128xf32, #tpu.memory_space<vmem>>, vector<16x128xf32>
      %189 = arith.truncf %188 : vector<16x128xf32> to vector<16x128xbf16>
      %c0_84 = arith.constant 0 : index
      %c0_85 = arith.constant 0 : index
      %190 = vector.load %arg2[%c0_84, %c0_85] : memref<128x128xbf16, #tpu.memory_space<vmem>>, vector<128x128xbf16>
      %cst_86 = arith.constant dense<0.000000e+00> : vector<16x128xf32>
      %191 = tpu.matmul %189, %190, %cst_86 {dimension_numbers = #tpu.dot_dimension_numbers<[1], [0], [0], [1], [0, 0, 1, 1], [], []>} : vector<16x128xbf16>, vector<128x128xbf16>, vector<16x128xf32> -> vector<16x128xf32>
      %c0_87 = arith.constant 0 : index
      %c0_88 = arith.constant 0 : index
      %192 = vector.load %arg8[%c0_87, %c0_88] : memref<16x128xf32, #tpu.memory_space<vmem>>, vector<16x128xf32>
      tpu.vector_store %arg8[%c0_87, %c0_88], %191 {strides = array<i32>} : memref<16x128xf32, #tpu.memory_space<vmem>>, vector<16x128xf32>,
    } else {
    }
    %c0 = arith.constant 0 : index
    %c0_1 = arith.constant 0 : index
    %3 = vector.load %arg8[%c0, %c0_1] : memref<16x128xf32, #tpu.memory_space<vmem>>, vector<16x128xf32>
    %cst = arith.constant dense<0.000000e+00> : vector<128xf32>
    %4 = vector.multi_reduction <add>, %3, %cst [0] : vector<16x128xf32> to vector<128xf32>
    %5 = vector.shape_cast %4 : vector<128xf32> to vector<1x128xf32>
    %cst_2 = arith.constant 6.250000e-02 : f32
    %6 = vector.broadcast %cst_2 : f32 to vector<1x128xf32>
    %7 = arith.mulf %5, %6 : vector<1x128xf32>
    %8 = vector.broadcast %7 : vector<1x128xf32> to vector<16x128xf32>
    %9 = arith.subf %3, %8 : vector<16x128xf32>
    %10 = arith.mulf %9, %9 : vector<16x128xf32>
    %cst_3 = arith.constant dense<0.000000e+00> : vector<128xf32>
    %11 = vector.multi_reduction <add>, %10, %cst_3 [0] : vector<16x128xf32> to vector<128xf32>
    %12 = vector.shape_cast %11 : vector<128xf32> to vector<1x128xf32>
    %cst_4 = arith.constant 6.250000e-02 : f32
    %13 = vector.broadcast %cst_4 : f32 to vector<1x128xf32>
    %14 = arith.mulf %12, %13 : vector<1x128xf32>
    %cst_5 = arith.constant 9.99999974E-6 : f32
    %15 = vector.broadcast %cst_5 : f32 to vector<1x128xf32>
    %16 = arith.addf %14, %15 : vector<1x128xf32>
    %17 = math.rsqrt %16 : vector<1x128xf32>
    %18 = vector.broadcast %17 : vector<1x128xf32> to vector<16x128xf32>
    %19 = arith.mulf %9, %18 : vector<16x128xf32>
    %cst_6 = arith.constant 0.000000e+00 : f32
    %20 = vector.broadcast %cst_6 : f32 to vector<16x128xf32>
    %21 = arith.maximumf %19, %20 : vector<16x128xf32>
    %22 = arith.truncf %21 : vector<16x128xf32> to vector<16x128xbf16>
    %c0_7 = arith.constant 0 : index
    %c0_8 = arith.constant 0 : index
    %c0_9 = arith.constant 0 : index
    %23 = vector.load %arg5[%c0_7, %c0_8, %c0_9] : memref<4x128x128xbf16, #tpu.memory_space<vmem>>, vector<1x128x128xbf16>
    %24 = vector.shape_cast %23 : vector<1x128x128xbf16> to vector<128x128xbf16>
    %cst_10 = arith.constant dense<0.000000e+00> : vector<16x128xf32>
    %25 = tpu.matmul %22, %24, %cst_10 {dimension_numbers = #tpu.dot_dimension_numbers<[1], [0], [0], [1], [0, 0, 1, 1], [], []>} : vector<16x128xbf16>, vector<128x128xbf16>, vector<16x128xf32> -> vector<16x128xf32>
    %cst_11 = arith.constant dense<0.000000e+00> : vector<128xf32>
    %26 = vector.multi_reduction <add>, %25, %cst_11 [0] : vector<16x128xf32> to vector<128xf32>
    %27 = vector.shape_cast %26 : vector<128xf32> to vector<1x128xf32>
    %cst_12 = arith.constant 6.250000e-02 : f32
    %28 = vector.broadcast %cst_12 : f32 to vector<1x128xf32>
    %29 = arith.mulf %27, %28 : vector<1x128xf32>
    %30 = vector.broadcast %29 : vector<1x128xf32> to vector<16x128xf32>
    %31 = arith.subf %25, %30 : vector<16x128xf32>
    %32 = arith.mulf %31, %31 : vector<16x128xf32>
    %cst_13 = arith.constant dense<0.000000e+00> : vector<128xf32>
    %33 = vector.multi_reduction <add>, %32, %cst_13 [0] : vector<16x128xf32> to vector<128xf32>
    %34 = vector.shape_cast %33 : vector<128xf32> to vector<1x128xf32>
    %cst_14 = arith.constant 6.250000e-02 : f32
    %35 = vector.broadcast %cst_14 : f32 to vector<1x128xf32>
    %36 = arith.mulf %34, %35 : vector<1x128xf32>
    %cst_15 = arith.constant 9.99999974E-6 : f32
    %37 = vector.broadcast %cst_15 : f32 to vector<1x128xf32>
    %38 = arith.addf %36, %37 : vector<1x128xf32>
    %39 = math.rsqrt %38 : vector<1x128xf32>
    %40 = vector.broadcast %39 : vector<1x128xf32> to vector<16x128xf32>
    %41 = arith.mulf %31, %40 : vector<16x128xf32>
    %cst_16 = arith.constant 0.000000e+00 : f32
    %42 = vector.broadcast %cst_16 : f32 to vector<16x128xf32>
    %43 = arith.maximumf %41, %42 : vector<16x128xf32>
    %44 = arith.truncf %43 : vector<16x128xf32> to vector<16x128xbf16>
    %c0_17 = arith.constant 0 : index
    %c0_18 = arith.constant 0 : index
    %c0_19 = arith.constant 0 : index
    %45 = vector.load %arg6[%c0_17, %c0_18, %c0_19] : memref<4x128x128xbf16, #tpu.memory_space<vmem>>, vector<1x128x128xbf16>
    %46 = vector.shape_cast %45 : vector<1x128x128xbf16> to vector<128x128xbf16>
    %cst_20 = arith.constant dense<0.000000e+00> : vector<16x128xf32>
    %47 = tpu.matmul %44, %46, %cst_20 {dimension_numbers = #tpu.dot_dimension_numbers<[1], [0], [0], [1], [0, 0, 1, 1], [], []>} : vector<16x128xbf16>, vector<128x128xbf16>, vector<16x128xf32> -> vector<16x128xf32>
    %48 = arith.addf %47, %3 : vector<16x128xf32>
    %cst_21 = arith.constant dense<0.000000e+00> : vector<128xf32>
    %49 = vector.multi_reduction <add>, %48, %cst_21 [0] : vector<16x128xf32> to vector<128xf32>
    %50 = vector.shape_cast %49 : vector<128xf32> to vector<1x128xf32>
    %cst_22 = arith.constant 6.250000e-02 : f32
    %51 = vector.broadcast %cst_22 : f32 to vector<1x128xf32>
    %52 = arith.mulf %50, %51 : vector<1x128xf32>
    %53 = vector.broadcast %52 : vector<1x128xf32> to vector<16x128xf32>
    %54 = arith.subf %48, %53 : vector<16x128xf32>
    %55 = arith.mulf %54, %54 : vector<16x128xf32>
    %cst_23 = arith.constant dense<0.000000e+00> : vector<128xf32>
    %56 = vector.multi_reduction <add>, %55, %cst_23 [0] : vector<16x128xf32> to vector<128xf32>
    %57 = vector.shape_cast %56 : vector<128xf32> to vector<1x128xf32>
    %cst_24 = arith.constant 6.250000e-02 : f32
    %58 = vector.broadcast %cst_24 : f32 to vector<1x128xf32>
    %59 = arith.mulf %57, %58 : vector<1x128xf32>
    %cst_25 = arith.constant 9.99999974E-6 : f32
    %60 = vector.broadcast %cst_25 : f32 to vector<1x128xf32>
    %61 = arith.addf %59, %60 : vector<1x128xf32>
    %62 = math.rsqrt %61 : vector<1x128xf32>
    %63 = vector.broadcast %62 : vector<1x128xf32> to vector<16x128xf32>
    %64 = arith.mulf %54, %63 : vector<16x128xf32>
    %cst_26 = arith.constant 0.000000e+00 : f32
    %65 = vector.broadcast %cst_26 : f32 to vector<16x128xf32>
    %66 = arith.maximumf %64, %65 : vector<16x128xf32>
    %67 = arith.truncf %66 : vector<16x128xf32> to vector<16x128xbf16>
    %c1 = arith.constant 1 : index
    %c0_27 = arith.constant 0 : index
    %c0_28 = arith.constant 0 : index
    %68 = vector.load %arg5[%c1, %c0_27, %c0_28] : memref<4x128x128xbf16, #tpu.memory_space<vmem>>, vector<1x128x128xbf16>
    %69 = vector.shape_cast %68 : vector<1x128x128xbf16> to vector<128x128xbf16>
    %cst_29 = arith.constant dense<0.000000e+00> : vector<16x128xf32>
    %70 = tpu.matmul %67, %69, %cst_29 {dimension_numbers = #tpu.dot_dimension_numbers<[1], [0], [0], [1], [0, 0, 1, 1], [], []>} : vector<16x128xbf16>, vector<128x128xbf16>, vector<16x128xf32> -> vector<16x128xf32>
    %cst_30 = arith.constant dense<0.000000e+00> : vector<128xf32>
    %71 = vector.multi_reduction <add>, %70, %cst_30 [0] : vector<16x128xf32> to vector<128xf32>
    %72 = vector.shape_cast %71 : vector<128xf32> to vector<1x128xf32>
    %cst_31 = arith.constant 6.250000e-02 : f32
    %73 = vector.broadcast %cst_31 : f32 to vector<1x128xf32>
    %74 = arith.mulf %72, %73 : vector<1x128xf32>
    %75 = vector.broadcast %74 : vector<1x128xf32> to vector<16x128xf32>
    %76 = arith.subf %70, %75 : vector<16x128xf32>
    %77 = arith.mulf %76, %76 : vector<16x128xf32>
    %cst_32 = arith.constant dense<0.000000e+00> : vector<128xf32>
    %78 = vector.multi_reduction <add>, %77, %cst_32 [0] : vector<16x128xf32> to vector<128xf32>
    %79 = vector.shape_cast %78 : vector<128xf32> to vector<1x128xf32>
    %cst_33 = arith.constant 6.250000e-02 : f32
    %80 = vector.broadcast %cst_33 : f32 to vector<1x128xf32>
    %81 = arith.mulf %79, %80 : vector<1x128xf32>
    %cst_34 = arith.constant 9.99999974E-6 : f32
    %82 = vector.broadcast %cst_34 : f32 to vector<1x128xf32>
    %83 = arith.addf %81, %82 : vector<1x128xf32>
    %84 = math.rsqrt %83 : vector<1x128xf32>
    %85 = vector.broadcast %84 : vector<1x128xf32> to vector<16x128xf32>
    %86 = arith.mulf %76, %85 : vector<16x128xf32>
    %cst_35 = arith.constant 0.000000e+00 : f32
    %87 = vector.broadcast %cst_35 : f32 to vector<16x128xf32>
    %88 = arith.maximumf %86, %87 : vector<16x128xf32>
    %89 = arith.truncf %88 : vector<16x128xf32> to vector<16x128xbf16>
    %c1_36 = arith.constant 1 : index
    %c0_37 = arith.constant 0 : index
    %c0_38 = arith.constant 0 : index
    %90 = vector.load %arg6[%c1_36, %c0_37, %c0_38] : memref<4x128x128xbf16, #tpu.memory_space<vmem>>, vector<1x128x128xbf16>
    %91 = vector.shape_cast %90 : vector<1x128x128xbf16> to vector<128x128xbf16>
    %cst_39 = arith.constant dense<0.000000e+00> : vector<16x128xf32>
    %92 = tpu.matmul %89, %91, %cst_39 {dimension_numbers = #tpu.dot_dimension_numbers<[1], [0], [0], [1], [0, 0, 1, 1], [], []>} : vector<16x128xbf16>, vector<128x128xbf16>, vector<16x128xf32> -> vector<16x128xf32>
    %93 = arith.addf %92, %48 : vector<16x128xf32>
    %cst_40 = arith.constant dense<0.000000e+00> : vector<128xf32>
    %94 = vector.multi_reduction <add>, %93, %cst_40 [0] : vector<16x128xf32> to vector<128xf32>
    %95 = vector.shape_cast %94 : vector<128xf32> to vector<1x128xf32>
    %cst_41 = arith.constant 6.250000e-02 : f32
    %96 = vector.broadcast %cst_41 : f32 to vector<1x128xf32>
    %97 = arith.mulf %95, %96 : vector<1x128xf32>
    %98 = vector.broadcast %97 : vector<1x128xf32> to vector<16x128xf32>
    %99 = arith.subf %93, %98 : vector<16x128xf32>
    %100 = arith.mulf %99, %99 : vector<16x128xf32>
    %cst_42 = arith.constant dense<0.000000e+00> : vector<128xf32>
    %101 = vector.multi_reduction <add>, %100, %cst_42 [0] : vector<16x128xf32> to vector<128xf32>
    %102 = vector.shape_cast %101 : vector<128xf32> to vector<1x128xf32>
    %cst_43 = arith.constant 6.250000e-02 : f32
    %103 = vector.broadcast %cst_43 : f32 to vector<1x128xf32>
    %104 = arith.mulf %102, %103 : vector<1x128xf32>
    %cst_44 = arith.constant 9.99999974E-6 : f32
    %105 = vector.broadcast %cst_44 : f32 to vector<1x128xf32>
    %106 = arith.addf %104, %105 : vector<1x128xf32>
    %107 = math.rsqrt %106 : vector<1x128xf32>
    %108 = vector.broadcast %107 : vector<1x128xf32> to vector<16x128xf32>
    %109 = arith.mulf %99, %108 : vector<16x128xf32>
    %cst_45 = arith.constant 0.000000e+00 : f32
    %110 = vector.broadcast %cst_45 : f32 to vector<16x128xf32>
    %111 = arith.maximumf %109, %110 : vector<16x128xf32>
    %112 = arith.truncf %111 : vector<16x128xf32> to vector<16x128xbf16>
    %c2 = arith.constant 2 : index
    %c0_46 = arith.constant 0 : index
    %c0_47 = arith.constant 0 : index
    %113 = vector.load %arg5[%c2, %c0_46, %c0_47] : memref<4x128x128xbf16, #tpu.memory_space<vmem>>, vector<1x128x128xbf16>
    %114 = vector.shape_cast %113 : vector<1x128x128xbf16> to vector<128x128xbf16>
    %cst_48 = arith.constant dense<0.000000e+00> : vector<16x128xf32>
    %115 = tpu.matmul %112, %114, %cst_48 {dimension_numbers = #tpu.dot_dimension_numbers<[1], [0], [0], [1], [0, 0, 1, 1], [], []>} : vector<16x128xbf16>, vector<128x128xbf16>, vector<16x128xf32> -> vector<16x128xf32>
    %cst_49 = arith.constant dense<0.000000e+00> : vector<128xf32>
    %116 = vector.multi_reduction <add>, %115, %cst_49 [0] : vector<16x128xf32> to vector<128xf32>
    %117 = vector.shape_cast %116 : vector<128xf32> to vector<1x128xf32>
    %cst_50 = arith.constant 6.250000e-02 : f32
    %118 = vector.broadcast %cst_50 : f32 to vector<1x128xf32>
    %119 = arith.mulf %117, %118 : vector<1x128xf32>
    %120 = vector.broadcast %119 : vector<1x128xf32> to vector<16x128xf32>
    %121 = arith.subf %115, %120 : vector<16x128xf32>
    %122 = arith.mulf %121, %121 : vector<16x128xf32>
    %cst_51 = arith.constant dense<0.000000e+00> : vector<128xf32>
    %123 = vector.multi_reduction <add>, %122, %cst_51 [0] : vector<16x128xf32> to vector<128xf32>
    %124 = vector.shape_cast %123 : vector<128xf32> to vector<1x128xf32>
    %cst_52 = arith.constant 6.250000e-02 : f32
    %125 = vector.broadcast %cst_52 : f32 to vector<1x128xf32>
    %126 = arith.mulf %124, %125 : vector<1x128xf32>
    %cst_53 = arith.constant 9.99999974E-6 : f32
    %127 = vector.broadcast %cst_53 : f32 to vector<1x128xf32>
    %128 = arith.addf %126, %127 : vector<1x128xf32>
    %129 = math.rsqrt %128 : vector<1x128xf32>
    %130 = vector.broadcast %129 : vector<1x128xf32> to vector<16x128xf32>
    %131 = arith.mulf %121, %130 : vector<16x128xf32>
    %cst_54 = arith.constant 0.000000e+00 : f32
    %132 = vector.broadcast %cst_54 : f32 to vector<16x128xf32>
    %133 = arith.maximumf %131, %132 : vector<16x128xf32>
    %134 = arith.truncf %133 : vector<16x128xf32> to vector<16x128xbf16>
    %c2_55 = arith.constant 2 : index
    %c0_56 = arith.constant 0 : index
    %c0_57 = arith.constant 0 : index
    %135 = vector.load %arg6[%c2_55, %c0_56, %c0_57] : memref<4x128x128xbf16, #tpu.memory_space<vmem>>, vector<1x128x128xbf16>
    %136 = vector.shape_cast %135 : vector<1x128x128xbf16> to vector<128x128xbf16>
    %cst_58 = arith.constant dense<0.000000e+00> : vector<16x128xf32>
    %137 = tpu.matmul %134, %136, %cst_58 {dimension_numbers = #tpu.dot_dimension_numbers<[1], [0], [0], [1], [0, 0, 1, 1], [], []>} : vector<16x128xbf16>, vector<128x128xbf16>, vector<16x128xf32> -> vector<16x128xf32>
    %138 = arith.addf %137, %93 : vector<16x128xf32>
    %cst_59 = arith.constant dense<0.000000e+00> : vector<128xf32>
    %139 = vector.multi_reduction <add>, %138, %cst_59 [0] : vector<16x128xf32> to vector<128xf32>
    %140 = vector.shape_cast %139 : vector<128xf32> to vector<1x128xf32>
    %cst_60 = arith.constant 6.250000e-02 : f32
    %141 = vector.broadcast %cst_60 : f32 to vector<1x128xf32>
    %142 = arith.mulf %140, %141 : vector<1x128xf32>
    %143 = vector.broadcast %142 : vector<1x128xf32> to vector<16x128xf32>
    %144 = arith.subf %138, %143 : vector<16x128xf32>
    %145 = arith.mulf %144, %144 : vector<16x128xf32>
    %cst_61 = arith.constant dense<0.000000e+00> : vector<128xf32>
    %146 = vector.multi_reduction <add>, %145, %cst_61 [0] : vector<16x128xf32> to vector<128xf32>
    %147 = vector.shape_cast %146 : vector<128xf32> to vector<1x128xf32>
    %cst_62 = arith.constant 6.250000e-02 : f32
    %148 = vector.broadcast %cst_62 : f32 to vector<1x128xf32>
    %149 = arith.mulf %147, %148 : vector<1x128xf32>
    %cst_63 = arith.constant 9.99999974E-6 : f32
    %150 = vector.broadcast %cst_63 : f32 to vector<1x128xf32>
    %151 = arith.addf %149, %150 : vector<1x128xf32>
    %152 = math.rsqrt %151 : vector<1x128xf32>
    %153 = vector.broadcast %152 : vector<1x128xf32> to vector<16x128xf32>
    %154 = arith.mulf %144, %153 : vector<16x128xf32>
    %cst_64 = arith.constant 0.000000e+00 : f32
    %155 = vector.broadcast %cst_64 : f32 to vector<16x128xf32>
    %156 = arith.maximumf %154, %155 : vector<16x128xf32>
    %157 = arith.truncf %156 : vector<16x128xf32> to vector<16x128xbf16>
    %c3 = arith.constant 3 : index
    %c0_65 = arith.constant 0 : index
    %c0_66 = arith.constant 0 : index
    %158 = vector.load %arg5[%c3, %c0_65, %c0_66] : memref<4x128x128xbf16, #tpu.memory_space<vmem>>, vector<1x128x128xbf16>
    %159 = vector.shape_cast %158 : vector<1x128x128xbf16> to vector<128x128xbf16>
    %cst_67 = arith.constant dense<0.000000e+00> : vector<16x128xf32>
    %160 = tpu.matmul %157, %159, %cst_67 {dimension_numbers = #tpu.dot_dimension_numbers<[1], [0], [0], [1], [0, 0, 1, 1], [], []>} : vector<16x128xbf16>, vector<128x128xbf16>, vector<16x128xf32> -> vector<16x128xf32>
    %cst_68 = arith.constant dense<0.000000e+00> : vector<128xf32>
    %161 = vector.multi_reduction <add>, %160, %cst_68 [0] : vector<16x128xf32> to vector<128xf32>
    %162 = vector.shape_cast %161 : vector<128xf32> to vector<1x128xf32>
    %cst_69 = arith.constant 6.250000e-02 : f32
    %163 = vector.broadcast %cst_69 : f32 to vector<1x128xf32>
    %164 = arith.mulf %162, %163 : vector<1x128xf32>
    %165 = vector.broadcast %164 : vector<1x128xf32> to vector<16x128xf32>
    %166 = arith.subf %160, %165 : vector<16x128xf32>
    %167 = arith.mulf %166, %166 : vector<16x128xf32>
    %cst_70 = arith.constant dense<0.000000e+00> : vector<128xf32>
    %168 = vector.multi_reduction <add>, %167, %cst_70 [0] : vector<16x128xf32> to vector<128xf32>
    %169 = vector.shape_cast %168 : vector<128xf32> to vector<1x128xf32>
    %cst_71 = arith.constant 6.250000e-02 : f32
    %170 = vector.broadcast %cst_71 : f32 to vector<1x128xf32>
    %171 = arith.mulf %169, %170 : vector<1x128xf32>
    %cst_72 = arith.constant 9.99999974E-6 : f32
    %172 = vector.broadcast %cst_72 : f32 to vector<1x128xf32>
    %173 = arith.addf %171, %172 : vector<1x128xf32>
    %174 = math.rsqrt %173 : vector<1x128xf32>
    %175 = vector.broadcast %174 : vector<1x128xf32> to vector<16x128xf32>
    %176 = arith.mulf %166, %175 : vector<16x128xf32>
    %cst_73 = arith.constant 0.000000e+00 : f32
    %177 = vector.broadcast %cst_73 : f32 to vector<16x128xf32>
    %178 = arith.maximumf %176, %177 : vector<16x128xf32>
    %179 = arith.truncf %178 : vector<16x128xf32> to vector<16x128xbf16>
    %c3_74 = arith.constant 3 : index
    %c0_75 = arith.constant 0 : index
    %c0_76 = arith.constant 0 : index
    %180 = vector.load %arg6[%c3_74, %c0_75, %c0_76] : memref<4x128x128xbf16, #tpu.memory_space<vmem>>, vector<1x128x128xbf16>
    %181 = vector.shape_cast %180 : vector<1x128x128xbf16> to vector<128x128xbf16>
    %cst_77 = arith.constant dense<0.000000e+00> : vector<16x128xf32>
    %182 = tpu.matmul %179, %181, %cst_77 {dimension_numbers = #tpu.dot_dimension_numbers<[1], [0], [0], [1], [0, 0, 1, 1], [], []>} : vector<16x128xbf16>, vector<128x128xbf16>, vector<16x128xf32> -> vector<16x128xf32>
    %183 = arith.addf %182, %138 : vector<16x128xf32>
    %c0_78 = arith.constant 0 : index
    %c0_79 = arith.constant 0 : index
    %184 = vector.load %arg8[%c0_78, %c0_79] : memref<16x128xf32, #tpu.memory_space<vmem>>, vector<16x128xf32>
    tpu.vector_store %arg8[%c0_78, %c0_79], %183 {strides = array<i32>} : memref<16x128xf32, #tpu.memory_space<vmem>>, vector<16x128xf32>,
    %c0_i32_80 = arith.constant 0 : i32
    %185 = arith.cmpi eq, %arg0, %c0_i32_80 : i32
    %186 = arith.extui %185 : i1 to i32
    %c0_i32_81 = arith.constant 0 : i32
    %187 = arith.cmpi ne, %186, %c0_i32_81 : i32
    scf.if %187 {
      %c0_82 = arith.constant 0 : index
      %c0_83 = arith.constant 0 : index
      %188 = vector.load %arg8[%c0_82, %c0_83] : memref<16x128xf32, #tpu.memory_space<vmem>>, vector<16x128xf32>
      %cst_84 = arith.constant dense<0.000000e+00> : vector<128xf32>
      %189 = vector.multi_reduction <add>, %188, %cst_84 [0] : vector<16x128xf32> to vector<128xf32>
      %190 = vector.shape_cast %189 : vector<128xf32> to vector<1x128xf32>
      %cst_85 = arith.constant 6.250000e-02 : f32
      %191 = vector.broadcast %cst_85 : f32 to vector<1x128xf32>
      %192 = arith.mulf %190, %191 : vector<1x128xf32>
      %193 = vector.broadcast %192 : vector<1x128xf32> to vector<16x128xf32>
      %194 = arith.subf %188, %193 : vector<16x128xf32>
      %195 = arith.mulf %194, %194 : vector<16x128xf32>
      %cst_86 = arith.constant dense<0.000000e+00> : vector<128xf32>
      %196 = vector.multi_reduction <add>, %195, %cst_86 [0] : vector<16x128xf32> to vector<128xf32>
      %197 = vector.shape_cast %196 : vector<128xf32> to vector<1x128xf32>
      %cst_87 = arith.constant 6.250000e-02 : f32
      %198 = vector.broadcast %cst_87 : f32 to vector<1x128xf32>
      %199 = arith.mulf %197, %198 : vector<1x128xf32>
      %cst_88 = arith.constant 9.99999974E-6 : f32
      %200 = vector.broadcast %cst_88 : f32 to vector<1x128xf32>
      %201 = arith.addf %199, %200 : vector<1x128xf32>
      %202 = math.rsqrt %201 : vector<1x128xf32>
      %203 = vector.broadcast %202 : vector<1x128xf32> to vector<16x128xf32>
      %204 = arith.mulf %194, %203 : vector<16x128xf32>
      %cst_89 = arith.constant 0.000000e+00 : f32
      %205 = vector.broadcast %cst_89 : f32 to vector<16x128xf32>
      %206 = arith.maximumf %204, %205 : vector<16x128xf32>
      %207 = arith.truncf %206 : vector<16x128xf32> to vector<16x128xbf16>
      %c0_90 = arith.constant 0 : index
      %c0_91 = arith.constant 0 : index
      %208 = vector.load %arg3[%c0_90, %c0_91] : memref<128x128xbf16, #tpu.memory_space<vmem>>, vector<128x128xbf16>
      %cst_92 = arith.constant dense<0.000000e+00> : vector<16x128xf32>
      %209 = tpu.matmul %207, %208, %cst_92 {dimension_numbers = #tpu.dot_dimension_numbers<[1], [0], [0], [1], [0, 0, 1, 1], [], []>} : vector<16x128xbf16>, vector<128x128xbf16>, vector<16x128xf32> -> vector<16x128xf32>
      %c0_93 = arith.constant 0 : index
      %c0_94 = arith.constant 0 : index
      %210 = vector.load %arg4[%c0_93, %c0_94] : memref<1x128xf32, #tpu.memory_space<vmem>>, vector<1x128xf32>
      %211 = vector.broadcast %210 : vector<1x128xf32> to vector<16x128xf32>
      %212 = arith.addf %209, %211 : vector<16x128xf32>
      %c0_95 = arith.constant 0 : index
      %c0_96 = arith.constant 0 : index
      %213 = vector.load %arg7[%c0_95, %c0_96] : memref<16x128xf32, #tpu.memory_space<vmem>>, vector<16x128xf32>
      tpu.vector_store %arg7[%c0_95, %c0_96], %212 {strides = array<i32>} : memref<16x128xf32, #tpu.memory_space<vmem>>, vector<16x128xf32>,
    } else {
    }
    return
  }
  func.func @transform_0(%arg0: i32) -> (i32, i32) {
    %c0_i32 = arith.constant 0 : i32
    %c0_i32_0 = arith.constant 0 : i32
    %c0_i32_1 = arith.constant 0 : i32
    return %c0_i32, %c0_i32_0 : i32, i32
  }
  func.func @transform_1(%arg0: i32) -> (i32, i32) {
    %c0_i32 = arith.constant 0 : i32
    %c0_i32_0 = arith.constant 0 : i32
    %c0_i32_1 = arith.constant 0 : i32
    return %c0_i32, %c0_i32_0 : i32, i32
  }
  func.func @transform_2(%arg0: i32) -> (i32, i32) {
    %c0_i32 = arith.constant 0 : i32
    %c0_i32_0 = arith.constant 0 : i32
    %c0_i32_1 = arith.constant 0 : i32
    return %c0_i32, %c0_i32_0 : i32, i32
  }
  func.func @transform_3(%arg0: i32) -> (i32, i32) {
    %c0_i32 = arith.constant 0 : i32
    %c0_i32_0 = arith.constant 0 : i32
    %c0_i32_1 = arith.constant 0 : i32
    return %c0_i32, %c0_i32_0 : i32, i32
  }
  func.func @transform_4(%arg0: i32) -> (i32, i32, i32) {
    %c0_i32 = arith.constant 0 : i32
    %c0_i32_0 = arith.constant 0 : i32
    %c0_i32_1 = arith.constant 0 : i32
    return %arg0, %c0_i32, %c0_i32_0 : i32, i32, i32
  }
  func.func @transform_5(%arg0: i32) -> (i32, i32, i32) {
    %c0_i32 = arith.constant 0 : i32
    %c0_i32_0 = arith.constant 0 : i32
    %c0_i32_1 = arith.constant 0 : i32
    return %arg0, %c0_i32, %c0_i32_0 : i32, i32, i32
  }
  func.func @transform_6(%arg0: i32) -> (i32, i32) {
    %c0_i32 = arith.constant 0 : i32
    %c0_i32_0 = arith.constant 0 : i32
    %c0_i32_1 = arith.constant 0 : i32
    return %c0_i32, %c0_i32_0 : i32, i32
  }
}

</mosaic_0001>

<llo_original>
// kernel: tpu_custom_call.1
$region0: #{tpu_custom_call.1}
  #allocation0 [shape = 'u32[]', space=smem, size = 0x4, offset = 0x4, fixed_abs, tag = 'smem constant byte address 0x4 - core index']
  #allocation1 [shape = 'u32[144,128]{1,0:T(1,128)}', space=vmem, size = 0x12000, scoped, tag = 'internal scratch']
  #allocation2 [shape = 'f32[16,128]{1,0:T(8,128)}', space=vmem, size = 0x2000, scoped, tag = 'scratch operand']
  %s0 = inlined_call_operand.hbm [shape: f32[16,128], index: 0, kind: input, shape index: {}]
  %s1 = inlined_call_operand.hbm [shape: bf16[128,128], index: 1, kind: input, shape index: {}]
  %s2 = inlined_call_operand.hbm [shape: bf16[128,128], index: 2, kind: input, shape index: {}]
  %s3 = inlined_call_operand.vmem [shape: f32[1,128], index: 3, kind: input, shape index: {}]
  %s4 = inlined_call_operand.hbm [shape: bf16[4,128,128], index: 4, kind: input, shape index: {}]
  %s5 = inlined_call_operand.hbm [shape: bf16[4,128,128], index: 5, kind: input, shape index: {}]
  %s6 = inlined_call_operand.hbm [shape: f32[16,128], index: 6, kind: output, shape index: {}]
  %s7 = sld [smem:[#allocation0]]
  $region62: #{tpu_custom_call.1} parent=0
    _
  %s9 = ssub.s32 1, %s7
  %s10 = scalar_select 0, %s9, %s7
  $region1: #{tpu_custom_call.1} parent=0
    #allocation3 [shape = 'u8[8192]{0}', space=vmem, size = 0x2000, scoped, tag = 'input window, operand 0, single buffered']
    #allocation4 [shape = 's32[1]{0}', space=sflag, size = 0x4, scoped, tag = 'scoped memory for tpu_custom_call.1']
    #allocation5 [shape = 's32[1]{0}', space=sflag, size = 0x4, scoped, tag = 'scoped memory for tpu_custom_call.1']
    #allocation6 [shape = 'u8[32768]{0}', space=vmem, size = 0x8000, scoped, tag = 'input window, operand 1, single buffered']
    #allocation7 [shape = 's32[1]{0}', space=sflag, size = 0x4, scoped, tag = 'scoped memory for tpu_custom_call.1']
    #allocation8 [shape = 'u8[32768]{0}', space=vmem, size = 0x8000, scoped, tag = 'input window, operand 2, single buffered']
    #allocation9 [shape = 'u8[131072]{0}', space=vmem, size = 0x20000, scoped, tag = 'input window, operand 4, single buffered']
    #allocation10 [shape = 's32[1]{0}', space=sflag, size = 0x4, scoped, tag = 'scoped memory for tpu_custom_call.1']
    #allocation11 [shape = 'u8[131072]{0}', space=vmem, size = 0x20000, scoped, tag = 'input window, operand 5, single buffered']
    #allocation12 [shape = 'u8[8192]{0}', space=vmem, size = 0x2000, scoped, tag = 'output window, operand 0, single buffered']
    %11 = vsyncpa [#allocation4], 0
    %12 = vsyncpa [#allocation7], 0
    %13 = vsyncpa [#allocation10], 0
    %14 = vsyncpa [#allocation5], 0
    // Predicated region
    $region2: #{tpu_custom_call.1} parent=1 // pred_check
      _
    $region3: #{tpu_custom_call.1} parent=1 // pred_check_branch
      %16 = sbr.rel (0) target = $region5
    $region4: #{tpu_custom_call.1} parent=1 // pred_region
      %s18 = ssub.s32 256, 256
      %19 = vsyncadd [#allocation4], %s18
      %s20 = sshll.u32 [#allocation3], 4
      %s21 = int_to_ptr.vmem [resolvable:$true] %s20
      %26 = dma.hbm_to_vmem [thread:$0]  %s0, 256, %s21, [#allocation4], 128, 128, 8
    $region5: #{tpu_custom_call.1} parent=1 // pred_fallthru
      _
    // Predicated region
    $region6: #{tpu_custom_call.1} parent=1 // pred_check
      _
    $region7: #{tpu_custom_call.1} parent=1 // pred_check_branch
      %28 = sbr.rel (0) target = $region9
    $region8: #{tpu_custom_call.1} parent=1 // pred_region
      %s30 = ssub.s32 1024, 1024
      %31 = vsyncadd [#allocation7], %s30
      %s32 = sshll.u32 [#allocation6], 4
      %s33 = int_to_ptr.vmem [resolvable:$true] %s32
      %38 = dma.hbm_to_vmem [thread:$0]  %s1, 1024, %s33, [#allocation7], 64, 64, 4
    $region9: #{tpu_custom_call.1} parent=1 // pred_fallthru
      _
    // Predicated region
    $region10: #{tpu_custom_call.1} parent=1 // pred_check
      _
    $region11: #{tpu_custom_call.1} parent=1 // pred_check_branch
      %40 = sbr.rel (0) target = $region13
    $region12: #{tpu_custom_call.1} parent=1 // pred_region
      %s42 = ssub.s32 1024, 1024
      %43 = vsyncadd [#allocation7], %s42
      %s44 = sshll.u32 [#allocation8], 4
      %s45 = int_to_ptr.vmem [resolvable:$true] %s44
      %50 = dma.hbm_to_vmem [thread:$0]  %s2, 1024, %s45, [#allocation7], 64, 64, 4
    $region13: #{tpu_custom_call.1} parent=1 // pred_fallthru
      _
    // Predicated region
    $region14: #{tpu_custom_call.1} parent=1 // pred_check
      _
    $region15: #{tpu_custom_call.1} parent=1 // pred_check_branch
      %52 = sbr.rel (0) target = $region17
    $region16: #{tpu_custom_call.1} parent=1 // pred_region
      _
    $region17: #{tpu_custom_call.1} parent=1 // pred_fallthru
      _
    // Predicated region
    $region18: #{tpu_custom_call.1} parent=1 // pred_check
      _
    $region19: #{tpu_custom_call.1} parent=1 // pred_check_branch
      %54 = sbr.rel (0) target = $region21
    $region20: #{tpu_custom_call.1} parent=1 // pred_region
      %s56 = ssub.s32 4096, 4096
      %57 = vsyncadd [#allocation10], %s56
      %s58 = sshll.u32 [#allocation9], 4
      %s59 = int_to_ptr.vmem [resolvable:$true] %s58
      %64 = dma.hbm_to_vmem [thread:$0]  %s4, 4096, %s59, [#allocation10], 64, 64, 4
    $region21: #{tpu_custom_call.1} parent=1 // pred_fallthru
      _
    // Predicated region
    $region22: #{tpu_custom_call.1} parent=1 // pred_check
      _
    $region23: #{tpu_custom_call.1} parent=1 // pred_check_branch
      %66 = sbr.rel (0) target = $region25
    $region24: #{tpu_custom_call.1} parent=1 // pred_region
      %s68 = ssub.s32 4096, 4096
      %69 = vsyncadd [#allocation10], %s68
      %s70 = sshll.u32 [#allocation11], 4
      %s71 = int_to_ptr.vmem [resolvable:$true] %s70
      %76 = dma.hbm_to_vmem [thread:$0]  %s5, 4096, %s71, [#allocation10], 64, 64, 4
    $region25: #{tpu_custom_call.1} parent=1 // pred_fallthru
      _
    // Predicated region
    $region26: #{tpu_custom_call.1} parent=1 // pred_check
      _
    $region27: #{tpu_custom_call.1} parent=1 // pred_check_branch
      %78 = sbr.rel (0) target = $region29
    $region28: #{tpu_custom_call.1} parent=1 // pred_region
      %79 = dma.done [#allocation4], 256
    $region29: #{tpu_custom_call.1} parent=1 // pred_fallthru
      _
    // Predicated region
    $region30: #{tpu_custom_call.1} parent=1 // pred_check
      _
    $region31: #{tpu_custom_call.1} parent=1 // pred_check_branch
      %81 = sbr.rel (0) target = $region33
    $region32: #{tpu_custom_call.1} parent=1 // pred_region
      %82 = dma.done [#allocation7], 1024
    $region33: #{tpu_custom_call.1} parent=1 // pred_fallthru
      _
    // Predicated region
    $region34: #{tpu_custom_call.1} parent=1 // pred_check
      _
    $region35: #{tpu_custom_call.1} parent=1 // pred_check_branch
      %84 = sbr.rel (0) target = $region37
    $region36: #{tpu_custom_call.1} parent=1 // pred_region
      %85 = dma.done [#allocation7], 1024
    $region37: #{tpu_custom_call.1} parent=1 // pred_fallthru
      _
    // Predicated region
    $region38: #{tpu_custom_call.1} parent=1 // pred_check
      _
    $region39: #{tpu_custom_call.1} parent=1 // pred_check_branch
      %87 = sbr.rel (0) target = $region41
    $region40: #{tpu_custom_call.1} parent=1 // pred_region
      %88 = dma.done [#allocation10], 4096
    $region41: #{tpu_custom_call.1} parent=1 // pred_fallthru
      _
    // Predicated region
    $region42: #{tpu_custom_call.1} parent=1 // pred_check
      _
    $region43: #{tpu_custom_call.1} parent=1 // pred_check_branch
      %90 = sbr.rel (0) target = $region45
    $region44: #{tpu_custom_call.1} parent=1 // pred_region
      %91 = dma.done [#allocation10], 4096
    $region45: #{tpu_custom_call.1} parent=1 // pred_fallthru
      _
    %p93 = scmp.eq.s32.totalorder 0, 0
    // Predicated region
    $region46: #{tpu_custom_call.1} parent=1 // pred_check
      %p94 = pneg %p93
    $region47: #{tpu_custom_call.1} parent=1 // pred_check_branch
      %96 = sbr.rel (%p94) target = $region49
    $region48: #{tpu_custom_call.1} parent=1 // pred_region
      %v97 = vld [vmem:[#allocation3] sm:$0xff]
      %v98 = vld [vmem:[#allocation3 + $0x8] sm:$0xff]
      %v99 = vpack.c.bf16 %v98, %v97
      %v100 = vld [vmem:[#allocation6] sm:$0xf]
      %v101 = vld [vmem:[#allocation6 + $0x4] sm:$0xf]
      %v102 = vld [vmem:[#allocation6 + $0x8] sm:$0xf]
      %v103 = vld [vmem:[#allocation6 + $0xc] sm:$0xf]
      %v104 = vld [vmem:[#allocation6 + $0x10] sm:$0xf]
      %v105 = vld [vmem:[#allocation6 + $0x14] sm:$0xf]
      %v106 = vld [vmem:[#allocation6 + $0x18] sm:$0xf]
      %v107 = vld [vmem:[#allocation6 + $0x1c] sm:$0xf]
      %v108 = vld [vmem:[#allocation6 + $0x20] sm:$0xf]
      %v109 = vld [vmem:[#allocation6 + $0x24] sm:$0xf]
      %v110 = vld [vmem:[#allocation6 + $0x28] sm:$0xf]
      %v111 = vld [vmem:[#allocation6 + $0x2c] sm:$0xf]
      %v112 = vld [vmem:[#allocation6 + $0x30] sm:$0xf]
      %v113 = vld [vmem:[#allocation6 + $0x34] sm:$0xf]
      %v114 = vld [vmem:[#allocation6 + $0x38] sm:$0xf]
      %v115 = vld [vmem:[#allocation6 + $0x3c] sm:$0xf]
      %v132 = vunpack.c.l.b16 %v100
      %v133 = vunpack.c.l.b16 %v101
      %v134 = vunpack.c.l.b16 %v102
      %v135 = vunpack.c.l.b16 %v103
      %v136 = vunpack.c.l.b16 %v104
      %v137 = vunpack.c.l.b16 %v105
      %v138 = vunpack.c.l.b16 %v106
      %v139 = vunpack.c.l.b16 %v107
      %v140 = vunpack.c.l.b16 %v108
      %v141 = vunpack.c.l.b16 %v109
      %v142 = vunpack.c.l.b16 %v110
      %v143 = vunpack.c.l.b16 %v111
      %v144 = vunpack.c.l.b16 %v112
      %v145 = vunpack.c.l.b16 %v113
      %v146 = vunpack.c.l.b16 %v114
      %v147 = vunpack.c.l.b16 %v115
      %v148 = vpack.c.b16 %v133, %v132
      %v149 = vpack.c.b16 %v135, %v134
      %v150 = vpack.c.b16 %v137, %v136
      %v151 = vpack.c.b16 %v139, %v138
      %v152 = vpack.c.b16 %v141, %v140
      %v153 = vpack.c.b16 %v143, %v142
      %v154 = vpack.c.b16 %v145, %v144
      %v155 = vpack.c.b16 %v147, %v146
      %164 = vmatprep.subr.bf16.mxu0 0
      %165 = vmatpush1.bf16.msra.mxu0 %v148
      %166 = vmatprep.subr.bf16.mxu0 0
      %167 = vmatpush1.bf16.msra.mxu0 %v149
      %168 = vmatprep.subr.bf16.mxu0 0
      %169 = vmatpush1.bf16.msra.mxu0 %v150
      %170 = vmatprep.subr.bf16.mxu0 0
      %171 = vmatpush1.bf16.msra.mxu0 %v151
      %172 = vmatprep.subr.bf16.mxu0 0
      %173 = vmatpush1.bf16.msra.mxu0 %v152
      %174 = vmatprep.subr.bf16.mxu0 0
      %175 = vmatpush1.bf16.msra.mxu0 %v153
      %176 = vmatprep.subr.bf16.mxu0 0
      %177 = vmatpush1.bf16.msra.mxu0 %v154
      %178 = vmatprep.subr.bf16.mxu0 0
      %179 = vmatpush1.bf16.msra.mxu0 %v155
      %180 = vmatprep.subr.bf16.mxu0 0
      %181 = vmatpush1.bf16.msra.mxu0 0
      %182 = vmatprep.subr.bf16.mxu0 0
      %183 = vmatpush1.bf16.msra.mxu0 0
      %184 = vmatprep.subr.bf16.mxu0 0
      %185 = vmatpush1.bf16.msra.mxu0 0
      %186 = vmatprep.subr.bf16.mxu0 0
      %187 = vmatpush1.bf16.msra.mxu0 0
      %188 = vmatprep.subr.bf16.mxu0 0
      %189 = vmatpush1.bf16.msra.mxu0 0
      %190 = vmatprep.subr.bf16.mxu0 0
      %191 = vmatpush1.bf16.msra.mxu0 0
      %192 = vmatprep.subr.bf16.mxu0 0
      %193 = vmatpush1.bf16.msra.mxu0 0
      %194 = vmatprep.subr.bf16.mxu0 0
      %195 = vmatpush1.bf16.msra.mxu0 0
      %196 = vmatprep.mubr.bf16.mxu0 0
      %197 = vmatmul.mubr.bf16.gmra.mrb[0].mxu0 %v99
      %v198 = vpop.f32.mrb[0].mxu0
      %v199 = vadd.f32 0.0, %v198
      %v200 = vpop.f32.mrb[0].mxu0
      %v201 = vpop.f32.mrb[0].mxu0
      %v202 = vadd.f32 0.0, %v201
      %v203 = vpop.f32.mrb[0].mxu0
      %204 = vdwg.mxu0
      %205 = vst [vmem:[#allocation2] sm:$0xff] %v199
      %206 = vst [vmem:[#allocation2 + $0x8] sm:$0xff] %v202
    $region49: #{tpu_custom_call.1} parent=1 // pred_fallthru
      _
    %v207 = vld [vmem:[#allocation2] sm:$0xff]
    %v208 = vld [vmem:[#allocation2 + $0x8] sm:$0xff]
    %v209 = vadd.f32 %v207, %v208
    %v210 = vrot.slane %v209, 4
    %v211 = vadd.f32 %v209, %v210
    %v212 = vrot.slane %v211, 2
    %v213 = vadd.f32 %v211, %v212
    %v214 = vrot.slane %v213, 1
    %v215 = vadd.f32 %v213, %v214
    %v216 = vmul.f32 %v215, 0.0625
    %v217 = vsub.f32 %v207, %v216
    %v218 = vsub.f32 %v208, %v216
    %v219 = vmul.f32 %v217, %v217
    %v220 = vmul.f32 %v218, %v218
    %v221 = vadd.f32 %v219, %v220
    %v222 = vrot.slane %v221, 4
    %v223 = vadd.f32 %v221, %v222
    %v224 = vrot.slane %v223, 2
    %v225 = vadd.f32 %v223, %v224
    %v226 = vrot.slane %v225, 1
    %v227 = vadd.f32 %v225, %v226
    %v228 = vmul.f32 %v227, 0.0625
    %v229 = vadd.f32 %v228, 1e-05
    %v230 = vrsqrt.pop %v229
    %v231 = vmul.f32 %v217, %v230
    %v232 = vmul.f32 %v218, %v230
    %v233 = vmax.f32 %v231, 0.0
    %v234 = vmax.f32 %v232, 0.0
    %v235 = vpack.c.bf16 %v234, %v233
    %v236 = vld [vmem:[#allocation9] sm:$0xf]
    %v237 = vld [vmem:[#allocation9 + $0x4] sm:$0xf]
    %v238 = vld [vmem:[#allocation9 + $0x8] sm:$0xf]
    %v239 = vld [vmem:[#allocation9 + $0xc] sm:$0xf]
    %v240 = vld [vmem:[#allocation9 + $0x10] sm:$0xf]
    %v241 = vld [vmem:[#allocation9 + $0x14] sm:$0xf]
    %v242 = vld [vmem:[#allocation9 + $0x18] sm:$0xf]
    %v243 = vld [vmem:[#allocation9 + $0x1c] sm:$0xf]
    %v244 = vld [vmem:[#allocation9 + $0x20] sm:$0xf]
    %v245 = vld [vmem:[#allocation9 + $0x24] sm:$0xf]
    %v246 = vld [vmem:[#allocation9 + $0x28] sm:$0xf]
    %v247 = vld [vmem:[#allocation9 + $0x2c] sm:$0xf]
    %v248 = vld [vmem:[#allocation9 + $0x30] sm:$0xf]
    %v249 = vld [vmem:[#allocation9 + $0x34] sm:$0xf]
    %v250 = vld [vmem:[#allocation9 + $0x38] sm:$0xf]
    %v251 = vld [vmem:[#allocation9 + $0x3c] sm:$0xf]
    %v268 = vunpack.c.l.b16 %v236
    %v269 = vunpack.c.l.b16 %v237
    %v270 = vunpack.c.l.b16 %v238
    %v271 = vunpack.c.l.b16 %v239
    %v272 = vunpack.c.l.b16 %v240
    %v273 = vunpack.c.l.b16 %v241
    %v274 = vunpack.c.l.b16 %v242
    %v275 = vunpack.c.l.b16 %v243
    %v276 = vunpack.c.l.b16 %v244
    %v277 = vunpack.c.l.b16 %v245
    %v278 = vunpack.c.l.b16 %v246
    %v279 = vunpack.c.l.b16 %v247
    %v280 = vunpack.c.l.b16 %v248
    %v281 = vunpack.c.l.b16 %v249
    %v282 = vunpack.c.l.b16 %v250
    %v283 = vunpack.c.l.b16 %v251
    %v284 = vpack.c.b16 %v269, %v268
    %v285 = vpack.c.b16 %v271, %v270
    %v286 = vpack.c.b16 %v273, %v272
    %v287 = vpack.c.b16 %v275, %v274
    %v288 = vpack.c.b16 %v277, %v276
    %v289 = vpack.c.b16 %v279, %v278
    %v290 = vpack.c.b16 %v281, %v280
    %v291 = vpack.c.b16 %v283, %v282
    %300 = vmatprep.subr.bf16.mxu0 0
    %301 = vmatpush1.bf16.msra.mxu0 %v284
    %302 = vmatprep.subr.bf16.mxu0 0
    %303 = vmatpush1.bf16.msra.mxu0 %v285
    %304 = vmatprep.subr.bf16.mxu0 0
    %305 = vmatpush1.bf16.msra.mxu0 %v286
    %306 = vmatprep.subr.bf16.mxu0 0
    %307 = vmatpush1.bf16.msra.mxu0 %v287
    %308 = vmatprep.subr.bf16.mxu0 0
    %309 = vmatpush1.bf16.msra.mxu0 %v288
    %310 = vmatprep.subr.bf16.mxu0 0
    %311 = vmatpush1.bf16.msra.mxu0 %v289
    %312 = vmatprep.subr.bf16.mxu0 0
    %313 = vmatpush1.bf16.msra.mxu0 %v290
    %314 = vmatprep.subr.bf16.mxu0 0
    %315 = vmatpush1.bf16.msra.mxu0 %v291
    %316 = vmatprep.subr.bf16.mxu0 0
    %317 = vmatpush1.bf16.msra.mxu0 0
    %318 = vmatprep.subr.bf16.mxu0 0
    %319 = vmatpush1.bf16.msra.mxu0 0
    %320 = vmatprep.subr.bf16.mxu0 0
    %321 = vmatpush1.bf16.msra.mxu0 0
    %322 = vmatprep.subr.bf16.mxu0 0
    %323 = vmatpush1.bf16.msra.mxu0 0
    %324 = vmatprep.subr.bf16.mxu0 0
    %325 = vmatpush1.bf16.msra.mxu0 0
    %326 = vmatprep.subr.bf16.mxu0 0
    %327 = vmatpush1.bf16.msra.mxu0 0
    %328 = vmatprep.subr.bf16.mxu0 0
    %329 = vmatpush1.bf16.msra.mxu0 0
    %330 = vmatprep.subr.bf16.mxu0 0
    %331 = vmatpush1.bf16.msra.mxu0 0
    %332 = vmatprep.mubr.bf16.mxu0 0
    %333 = vmatmul.mubr.bf16.gmra.mrb[0].mxu0 %v235
    %v334 = vpop.f32.mrb[0].mxu0
    %v335 = vadd.f32 0.0, %v334
    %v336 = vpop.f32.mrb[0].mxu0
    %v337 = vpop.f32.mrb[0].mxu0
    %v338 = vadd.f32 0.0, %v337
    %v339 = vpop.f32.mrb[0].mxu0
    %340 = vdwg.mxu0
    %v341 = vadd.f32 %v335, %v338
    %v342 = vrot.slane %v341, 4
    %v343 = vadd.f32 %v341, %v342
    %v344 = vrot.slane %v343, 2
    %v345 = vadd.f32 %v343, %v344
    %v346 = vrot.slane %v345, 1
    %v347 = vadd.f32 %v345, %v346
    %v348 = vmul.f32 %v347, 0.0625
    %v349 = vsub.f32 %v335, %v348
    %v350 = vsub.f32 %v338, %v348
    %v351 = vmul.f32 %v349, %v349
    %v352 = vmul.f32 %v350, %v350
    %v353 = vadd.f32 %v351, %v352
    %v354 = vrot.slane %v353, 4
    %v355 = vadd.f32 %v353, %v354
    %v356 = vrot.slane %v355, 2
    %v357 = vadd.f32 %v355, %v356
    %v358 = vrot.slane %v357, 1
    %v359 = vadd.f32 %v357, %v358
    %v360 = vmul.f32 %v359, 0.0625
    %v361 = vadd.f32 %v360, 1e-05
    %v362 = vrsqrt.pop %v361
    %v363 = vmul.f32 %v349, %v362
    %v364 = vmul.f32 %v350, %v362
    %v365 = vmax.f32 %v363, 0.0
    %v366 = vmax.f32 %v364, 0.0
    %v367 = vpack.c.bf16 %v366, %v365
    %v368 = vld [vmem:[#allocation11] sm:$0xf]
    %v369 = vld [vmem:[#allocation11 + $0x4] sm:$0xf]
    %v370 = vld [vmem:[#allocation11 + $0x8] sm:$0xf]
    %v371 = vld [vmem:[#allocation11 + $0xc] sm:$0xf]
    %v372 = vld [vmem:[#allocation11 + $0x10] sm:$0xf]
    %v373 = vld [vmem:[#allocation11 + $0x14] sm:$0xf]
    %v374 = vld [vmem:[#allocation11 + $0x18] sm:$0xf]
    %v375 = vld [vmem:[#allocation11 + $0x1c] sm:$0xf]
    %v376 = vld [vmem:[#allocation11 + $0x20] sm:$0xf]
    %v377 = vld [vmem:[#allocation11 + $0x24] sm:$0xf]
    %v378 = vld [vmem:[#allocation11 + $0x28] sm:$0xf]
    %v379 = vld [vmem:[#allocation11 + $0x2c] sm:$0xf]
    %v380 = vld [vmem:[#allocation11 + $0x30] sm:$0xf]
    %v381 = vld [vmem:[#allocation11 + $0x34] sm:$0xf]
    %v382 = vld [vmem:[#allocation11 + $0x38] sm:$0xf]
    %v383 = vld [vmem:[#allocation11 + $0x3c] sm:$0xf]
    %v400 = vunpack.c.l.b16 %v368
    %v401 = vunpack.c.l.b16 %v369
    %v402 = vunpack.c.l.b16 %v370
    %v403 = vunpack.c.l.b16 %v371
    %v404 = vunpack.c.l.b16 %v372
    %v405 = vunpack.c.l.b16 %v373
    %v406 = vunpack.c.l.b16 %v374
    %v407 = vunpack.c.l.b16 %v375
    %v408 = vunpack.c.l.b16 %v376
    %v409 = vunpack.c.l.b16 %v377
    %v410 = vunpack.c.l.b16 %v378
    %v411 = vunpack.c.l.b16 %v379
    %v412 = vunpack.c.l.b16 %v380
    %v413 = vunpack.c.l.b16 %v381
    %v414 = vunpack.c.l.b16 %v382
    %v415 = vunpack.c.l.b16 %v383
    %v416 = vpack.c.b16 %v401, %v400
    %v417 = vpack.c.b16 %v403, %v402
    %v418 = vpack.c.b16 %v405, %v404
    %v419 = vpack.c.b16 %v407, %v406
    %v420 = vpack.c.b16 %v409, %v408
    %v421 = vpack.c.b16 %v411, %v410
    %v422 = vpack.c.b16 %v413, %v412
    %v423 = vpack.c.b16 %v415, %v414
    %432 = vmatprep.subr.bf16.mxu0 0
    %433 = vmatpush1.bf16.msra.mxu0 %v416
    %434 = vmatprep.subr.bf16.mxu0 0
    %435 = vmatpush1.bf16.msra.mxu0 %v417
    %436 = vmatprep.subr.bf16.mxu0 0
    %437 = vmatpush1.bf16.msra.mxu0 %v418
    %438 = vmatprep.subr.bf16.mxu0 0
    %439 = vmatpush1.bf16.msra.mxu0 %v419
    %440 = vmatprep.subr.bf16.mxu0 0
    %441 = vmatpush1.bf16.msra.mxu0 %v420
    %442 = vmatprep.subr.bf16.mxu0 0
    %443 = vmatpush1.bf16.msra.mxu0 %v421
    %444 = vmatprep.subr.bf16.mxu0 0
    %445 = vmatpush1.bf16.msra.mxu0 %v422
    %446 = vmatprep.subr.bf16.mxu0 0
    %447 = vmatpush1.bf16.msra.mxu0 %v423
    %448 = vmatprep.subr.bf16.mxu0 0
    %449 = vmatpush1.bf16.msra.mxu0 0
    %450 = vmatprep.subr.bf16.mxu0 0
    %451 = vmatpush1.bf16.msra.mxu0 0
    %452 = vmatprep.subr.bf16.mxu0 0
    %453 = vmatpush1.bf16.msra.mxu0 0
    %454 = vmatprep.subr.bf16.mxu0 0
    %455 = vmatpush1.bf16.msra.mxu0 0
    %456 = vmatprep.subr.bf16.mxu0 0
    %457 = vmatpush1.bf16.msra.mxu0 0
    %458 = vmatprep.subr.bf16.mxu0 0
    %459 = vmatpush1.bf16.msra.mxu0 0
    %460 = vmatprep.subr.bf16.mxu0 0
    %461 = vmatpush1.bf16.msra.mxu0 0
    %462 = vmatprep.subr.bf16.mxu0 0
    %463 = vmatpush1.bf16.msra.mxu0 0
    %464 = vmatprep.mubr.bf16.mxu0 0
    %465 = vmatmul.mubr.bf16.gmra.mrb[0].mxu0 %v367
    %v466 = vpop.f32.mrb[0].mxu0
    %v467 = vadd.f32 %v207, %v466
    %v468 = vpop.f32.mrb[0].mxu0
    %v469 = vpop.f32.mrb[0].mxu0
    %v470 = vadd.f32 %v208, %v469
    %v471 = vpop.f32.mrb[0].mxu0
    %472 = vdwg.mxu0
    %v473 = vadd.f32 %v467, %v470
    %v474 = vrot.slane %v473, 4
    %v475 = vadd.f32 %v473, %v474
    %v476 = vrot.slane %v475, 2
    %v477 = vadd.f32 %v475, %v476
    %v478 = vrot.slane %v477, 1
    %v479 = vadd.f32 %v477, %v478
    %v480 = vmul.f32 %v479, 0.0625
    %v481 = vsub.f32 %v467, %v480
    %v482 = vsub.f32 %v470, %v480
    %v483 = vmul.f32 %v481, %v481
    %v484 = vmul.f32 %v482, %v482
    %v485 = vadd.f32 %v483, %v484
    %v486 = vrot.slane %v485, 4
    %v487 = vadd.f32 %v485, %v486
    %v488 = vrot.slane %v487, 2
    %v489 = vadd.f32 %v487, %v488
    %v490 = vrot.slane %v489, 1
    %v491 = vadd.f32 %v489, %v490
    %v492 = vmul.f32 %v491, 0.0625
    %v493 = vadd.f32 %v492, 1e-05
    %v494 = vrsqrt.pop %v493
    %v495 = vmul.f32 %v481, %v494
    %v496 = vmul.f32 %v482, %v494
    %v497 = vmax.f32 %v495, 0.0
    %v498 = vmax.f32 %v496, 0.0
    %v499 = vpack.c.bf16 %v498, %v497
    %s500 = scalar_lea.vmem [#allocation9], 64
    %v501 = vld [vmem:[%s500] sm:$0xf]
    %v502 = vld [vmem:[%s500 + $0x4] sm:$0xf]
    %v503 = vld [vmem:[%s500 + $0x8] sm:$0xf]
    %v504 = vld [vmem:[%s500 + $0xc] sm:$0xf]
    %v505 = vld [vmem:[%s500 + $0x10] sm:$0xf]
    %v506 = vld [vmem:[%s500 + $0x14] sm:$0xf]
    %v507 = vld [vmem:[%s500 + $0x18] sm:$0xf]
    %v508 = vld [vmem:[%s500 + $0x1c] sm:$0xf]
    %v509 = vld [vmem:[%s500 + $0x20] sm:$0xf]
    %v510 = vld [vmem:[%s500 + $0x24] sm:$0xf]
    %v511 = vld [vmem:[%s500 + $0x28] sm:$0xf]
    %v512 = vld [vmem:[%s500 + $0x2c] sm:$0xf]
    %v513 = vld [vmem:[%s500 + $0x30] sm:$0xf]
    %v514 = vld [vmem:[%s500 + $0x34] sm:$0xf]
    %v515 = vld [vmem:[%s500 + $0x38] sm:$0xf]
    %v516 = vld [vmem:[%s500 + $0x3c] sm:$0xf]
    %v533 = vunpack.c.l.b16 %v501
    %v534 = vunpack.c.l.b16 %v502
    %v535 = vunpack.c.l.b16 %v503
    %v536 = vunpack.c.l.b16 %v504
    %v537 = vunpack.c.l.b16 %v505
    %v538 = vunpack.c.l.b16 %v506
    %v539 = vunpack.c.l.b16 %v507
    %v540 = vunpack.c.l.b16 %v508
    %v541 = vunpack.c.l.b16 %v509
    %v542 = vunpack.c.l.b16 %v510
    %v543 = vunpack.c.l.b16 %v511
    %v544 = vunpack.c.l.b16 %v512
    %v545 = vunpack.c.l.b16 %v513
    %v546 = vunpack.c.l.b16 %v514
    %v547 = vunpack.c.l.b16 %v515
    %v548 = vunpack.c.l.b16 %v516
    %v549 = vpack.c.b16 %v534, %v533
    %v550 = vpack.c.b16 %v536, %v535
    %v551 = vpack.c.b16 %v538, %v537
    %v552 = vpack.c.b16 %v540, %v539
    %v553 = vpack.c.b16 %v542, %v541
    %v554 = vpack.c.b16 %v544, %v543
    %v555 = vpack.c.b16 %v546, %v545
    %v556 = vpack.c.b16 %v548, %v547
    %565 = vmatprep.subr.bf16.mxu0 0
    %566 = vmatpush1.bf16.msra.mxu0 %v549
    %567 = vmatprep.subr.bf16.mxu0 0
    %568 = vmatpush1.bf16.msra.mxu0 %v550
    %569 = vmatprep.subr.bf16.mxu0 0
    %570 = vmatpush1.bf16.msra.mxu0 %v551
    %571 = vmatprep.subr.bf16.mxu0 0
    %572 = vmatpush1.bf16.msra.mxu0 %v552
    %573 = vmatprep.subr.bf16.mxu0 0
    %574 = vmatpush1.bf16.msra.mxu0 %v553
    %575 = vmatprep.subr.bf16.mxu0 0
    %576 = vmatpush1.bf16.msra.mxu0 %v554
    %577 = vmatprep.subr.bf16.mxu0 0
    %578 = vmatpush1.bf16.msra.mxu0 %v555
    %579 = vmatprep.subr.bf16.mxu0 0
    %580 = vmatpush1.bf16.msra.mxu0 %v556
    %581 = vmatprep.subr.bf16.mxu0 0
    %582 = vmatpush1.bf16.msra.mxu0 0
    %583 = vmatprep.subr.bf16.mxu0 0
    %584 = vmatpush1.bf16.msra.mxu0 0
    %585 = vmatprep.subr.bf16.mxu0 0
    %586 = vmatpush1.bf16.msra.mxu0 0
    %587 = vmatprep.subr.bf16.mxu0 0
    %588 = vmatpush1.bf16.msra.mxu0 0
    %589 = vmatprep.subr.bf16.mxu0 0
    %590 = vmatpush1.bf16.msra.mxu0 0
    %591 = vmatprep.subr.bf16.mxu0 0
    %592 = vmatpush1.bf16.msra.mxu0 0
    %593 = vmatprep.subr.bf16.mxu0 0
    %594 = vmatpush1.bf16.msra.mxu0 0
    %595 = vmatprep.subr.bf16.mxu0 0
    %596 = vmatpush1.bf16.msra.mxu0 0
    %597 = vmatprep.mubr.bf16.mxu0 0
    %598 = vmatmul.mubr.bf16.gmra.mrb[0].mxu0 %v499
    %v599 = vpop.f32.mrb[0].mxu0
    %v600 = vadd.f32 0.0, %v599
    %v601 = vpop.f32.mrb[0].mxu0
    %v602 = vpop.f32.mrb[0].mxu0
    %v603 = vadd.f32 0.0, %v602
    %v604 = vpop.f32.mrb[0].mxu0
    %605 = vdwg.mxu0
    %v606 = vadd.f32 %v600, %v603
    %v607 = vrot.slane %v606, 4
    %v608 = vadd.f32 %v606, %v607
    %v609 = vrot.slane %v608, 2
    %v610 = vadd.f32 %v608, %v609
    %v611 = vrot.slane %v610, 1
    %v612 = vadd.f32 %v610, %v611
    %v613 = vmul.f32 %v612, 0.0625
    %v614 = vsub.f32 %v600, %v613
    %v615 = vsub.f32 %v603, %v613
    %v616 = vmul.f32 %v614, %v614
    %v617 = vmul.f32 %v615, %v615
    %v618 = vadd.f32 %v616, %v617
    %v619 = vrot.slane %v618, 4
    %v620 = vadd.f32 %v618, %v619
    %v621 = vrot.slane %v620, 2
    %v622 = vadd.f32 %v620, %v621
    %v623 = vrot.slane %v622, 1
    %v624 = vadd.f32 %v622, %v623
    %v625 = vmul.f32 %v624, 0.0625
    %v626 = vadd.f32 %v625, 1e-05
    %v627 = vrsqrt.pop %v626
    %v628 = vmul.f32 %v614, %v627
    %v629 = vmul.f32 %v615, %v627
    %v630 = vmax.f32 %v628, 0.0
    %v631 = vmax.f32 %v629, 0.0
    %v632 = vpack.c.bf16 %v631, %v630
    %s633 = scalar_lea.vmem [#allocation11], 64
    %v634 = vld [vmem:[%s633] sm:$0xf]
    %v635 = vld [vmem:[%s633 + $0x4] sm:$0xf]
    %v636 = vld [vmem:[%s633 + $0x8] sm:$0xf]
    %v637 = vld [vmem:[%s633 + $0xc] sm:$0xf]
    %v638 = vld [vmem:[%s633 + $0x10] sm:$0xf]
    %v639 = vld [vmem:[%s633 + $0x14] sm:$0xf]
    %v640 = vld [vmem:[%s633 + $0x18] sm:$0xf]
    %v641 = vld [vmem:[%s633 + $0x1c] sm:$0xf]
    %v642 = vld [vmem:[%s633 + $0x20] sm:$0xf]
    %v643 = vld [vmem:[%s633 + $0x24] sm:$0xf]
    %v644 = vld [vmem:[%s633 + $0x28] sm:$0xf]
    %v645 = vld [vmem:[%s633 + $0x2c] sm:$0xf]
    %v646 = vld [vmem:[%s633 + $0x30] sm:$0xf]
    %v647 = vld [vmem:[%s633 + $0x34] sm:$0xf]
    %v648 = vld [vmem:[%s633 + $0x38] sm:$0xf]
    %v649 = vld [vmem:[%s633 + $0x3c] sm:$0xf]
    %v666 = vunpack.c.l.b16 %v634
    %v667 = vunpack.c.l.b16 %v635
    %v668 = vunpack.c.l.b16 %v636
    %v669 = vunpack.c.l.b16 %v637
    %v670 = vunpack.c.l.b16 %v638
    %v671 = vunpack.c.l.b16 %v639
    %v672 = vunpack.c.l.b16 %v640
    %v673 = vunpack.c.l.b16 %v641
    %v674 = vunpack.c.l.b16 %v642
    %v675 = vunpack.c.l.b16 %v643
    %v676 = vunpack.c.l.b16 %v644
    %v677 = vunpack.c.l.b16 %v645
    %v678 = vunpack.c.l.b16 %v646
    %v679 = vunpack.c.l.b16 %v647
    %v680 = vunpack.c.l.b16 %v648
    %v681 = vunpack.c.l.b16 %v649
    %v682 = vpack.c.b16 %v667, %v666
    %v683 = vpack.c.b16 %v669, %v668
    %v684 = vpack.c.b16 %v671, %v670
    %v685 = vpack.c.b16 %v673, %v672
    %v686 = vpack.c.b16 %v675, %v674
    %v687 = vpack.c.b16 %v677, %v676
    %v688 = vpack.c.b16 %v679, %v678
    %v689 = vpack.c.b16 %v681, %v680
    %698 = vmatprep.subr.bf16.mxu0 0
    %699 = vmatpush1.bf16.msra.mxu0 %v682
    %700 = vmatprep.subr.bf16.mxu0 0
    %701 = vmatpush1.bf16.msra.mxu0 %v683
    %702 = vmatprep.subr.bf16.mxu0 0
    %703 = vmatpush1.bf16.msra.mxu0 %v684
    %704 = vmatprep.subr.bf16.mxu0 0
    %705 = vmatpush1.bf16.msra.mxu0 %v685
    %706 = vmatprep.subr.bf16.mxu0 0
    %707 = vmatpush1.bf16.msra.mxu0 %v686
    %708 = vmatprep.subr.bf16.mxu0 0
    %709 = vmatpush1.bf16.msra.mxu0 %v687
    %710 = vmatprep.subr.bf16.mxu0 0
    %711 = vmatpush1.bf16.msra.mxu0 %v688
    %712 = vmatprep.subr.bf16.mxu0 0
    %713 = vmatpush1.bf16.msra.mxu0 %v689
    %714 = vmatprep.subr.bf16.mxu0 0
    %715 = vmatpush1.bf16.msra.mxu0 0
    %716 = vmatprep.subr.bf16.mxu0 0
    %717 = vmatpush1.bf16.msra.mxu0 0
    %718 = vmatprep.subr.bf16.mxu0 0
    %719 = vmatpush1.bf16.msra.mxu0 0
    %720 = vmatprep.subr.bf16.mxu0 0
    %721 = vmatpush1.bf16.msra.mxu0 0
    %722 = vmatprep.subr.bf16.mxu0 0
    %723 = vmatpush1.bf16.msra.mxu0 0
    %724 = vmatprep.subr.bf16.mxu0 0
    %725 = vmatpush1.bf16.msra.mxu0 0
    %726 = vmatprep.subr.bf16.mxu0 0
    %727 = vmatpush1.bf16.msra.mxu0 0
    %728 = vmatprep.subr.bf16.mxu0 0
    %729 = vmatpush1.bf16.msra.mxu0 0
    %730 = vmatprep.mubr.bf16.mxu0 0
    %731 = vmatmul.mubr.bf16.gmra.mrb[0].mxu0 %v632
    %v732 = vpop.f32.mrb[0].mxu0
    %v733 = vadd.f32 %v467, %v732
    %v734 = vpop.f32.mrb[0].mxu0
    %v735 = vpop.f32.mrb[0].mxu0
    %v736 = vadd.f32 %v470, %v735
    %v737 = vpop.f32.mrb[0].mxu0
    %738 = vdwg.mxu0
    %v739 = vadd.f32 %v733, %v736
    %v740 = vrot.slane %v739, 4
    %v741 = vadd.f32 %v739, %v740
    %v742 = vrot.slane %v741, 2
    %v743 = vadd.f32 %v741, %v742
    %v744 = vrot.slane %v743, 1
    %v745 = vadd.f32 %v743, %v744
    %v746 = vmul.f32 %v745, 0.0625
    %v747 = vsub.f32 %v733, %v746
    %v748 = vsub.f32 %v736, %v746
    %v749 = vmul.f32 %v747, %v747
    %v750 = vmul.f32 %v748, %v748
    %v751 = vadd.f32 %v749, %v750
    %v752 = vrot.slane %v751, 4
    %v753 = vadd.f32 %v751, %v752
    %v754 = vrot.slane %v753, 2
    %v755 = vadd.f32 %v753, %v754
    %v756 = vrot.slane %v755, 1
    %v757 = vadd.f32 %v755, %v756
    %v758 = vmul.f32 %v757, 0.0625
    %v759 = vadd.f32 %v758, 1e-05
    %v760 = vrsqrt.pop %v759
    %v761 = vmul.f32 %v747, %v760
    %v762 = vmul.f32 %v748, %v760
    %v763 = vmax.f32 %v761, 0.0
    %v764 = vmax.f32 %v762, 0.0
    %v765 = vpack.c.bf16 %v764, %v763
    %s766 = scalar_lea.vmem [#allocation9], 128
    %v767 = vld [vmem:[%s766] sm:$0xf]
    %v768 = vld [vmem:[%s766 + $0x4] sm:$0xf]
    %v769 = vld [vmem:[%s766 + $0x8] sm:$0xf]
    %v770 = vld [vmem:[%s766 + $0xc] sm:$0xf]
    %v771 = vld [vmem:[%s766 + $0x10] sm:$0xf]
    %v772 = vld [vmem:[%s766 + $0x14] sm:$0xf]
    %v773 = vld [vmem:[%s766 + $0x18] sm:$0xf]
    %v774 = vld [vmem:[%s766 + $0x1c] sm:$0xf]
    %v775 = vld [vmem:[%s766 + $0x20] sm:$0xf]
    %v776 = vld [vmem:[%s766 + $0x24] sm:$0xf]
    %v777 = vld [vmem:[%s766 + $0x28] sm:$0xf]
    %v778 = vld [vmem:[%s766 + $0x2c] sm:$0xf]
    %v779 = vld [vmem:[%s766 + $0x30] sm:$0xf]
    %v780 = vld [vmem:[%s766 + $0x34] sm:$0xf]
    %v781 = vld [vmem:[%s766 + $0x38] sm:$0xf]
    %v782 = vld [vmem:[%s766 + $0x3c] sm:$0xf]
    %v799 = vunpack.c.l.b16 %v767
    %v800 = vunpack.c.l.b16 %v768
    %v801 = vunpack.c.l.b16 %v769
    %v802 = vunpack.c.l.b16 %v770
    %v803 = vunpack.c.l.b16 %v771
    %v804 = vunpack.c.l.b16 %v772
    %v805 = vunpack.c.l.b16 %v773
    %v806 = vunpack.c.l.b16 %v774
    %v807 = vunpack.c.l.b16 %v775
    %v808 = vunpack.c.l.b16 %v776
    %v809 = vunpack.c.l.b16 %v777
    %v810 = vunpack.c.l.b16 %v778
    %v811 = vunpack.c.l.b16 %v779
    %v812 = vunpack.c.l.b16 %v780
    %v813 = vunpack.c.l.b16 %v781
    %v814 = vunpack.c.l.b16 %v782
    %v815 = vpack.c.b16 %v800, %v799
    %v816 = vpack.c.b16 %v802, %v801
    %v817 = vpack.c.b16 %v804, %v803
    %v818 = vpack.c.b16 %v806, %v805
    %v819 = vpack.c.b16 %v808, %v807
    %v820 = vpack.c.b16 %v810, %v809
    %v821 = vpack.c.b16 %v812, %v811
    %v822 = vpack.c.b16 %v814, %v813
    %831 = vmatprep.subr.bf16.mxu0 0
    %832 = vmatpush1.bf16.msra.mxu0 %v815
    %833 = vmatprep.subr.bf16.mxu0 0
    %834 = vmatpush1.bf16.msra.mxu0 %v816
    %835 = vmatprep.subr.bf16.mxu0 0
    %836 = vmatpush1.bf16.msra.mxu0 %v817
    %837 = vmatprep.subr.bf16.mxu0 0
    %838 = vmatpush1.bf16.msra.mxu0 %v818
    %839 = vmatprep.subr.bf16.mxu0 0
    %840 = vmatpush1.bf16.msra.mxu0 %v819
    %841 = vmatprep.subr.bf16.mxu0 0
    %842 = vmatpush1.bf16.msra.mxu0 %v820
    %843 = vmatprep.subr.bf16.mxu0 0
    %844 = vmatpush1.bf16.msra.mxu0 %v821
    %845 = vmatprep.subr.bf16.mxu0 0
    %846 = vmatpush1.bf16.msra.mxu0 %v822
    %847 = vmatprep.subr.bf16.mxu0 0
    %848 = vmatpush1.bf16.msra.mxu0 0
    %849 = vmatprep.subr.bf16.mxu0 0
    %850 = vmatpush1.bf16.msra.mxu0 0
    %851 = vmatprep.subr.bf16.mxu0 0
    %852 = vmatpush1.bf16.msra.mxu0 0
    %853 = vmatprep.subr.bf16.mxu0 0
    %854 = vmatpush1.bf16.msra.mxu0 0
    %855 = vmatprep.subr.bf16.mxu0 0
    %856 = vmatpush1.bf16.msra.mxu0 0
    %857 = vmatprep.subr.bf16.mxu0 0
    %858 = vmatpush1.bf16.msra.mxu0 0
    %859 = vmatprep.subr.bf16.mxu0 0
    %860 = vmatpush1.bf16.msra.mxu0 0
    %861 = vmatprep.subr.bf16.mxu0 0
    %862 = vmatpush1.bf16.msra.mxu0 0
    %863 = vmatprep.mubr.bf16.mxu0 0
    %864 = vmatmul.mubr.bf16.gmra.mrb[0].mxu0 %v765
    %v865 = vpop.f32.mrb[0].mxu0
    %v866 = vadd.f32 0.0, %v865
    %v867 = vpop.f32.mrb[0].mxu0
    %v868 = vpop.f32.mrb[0].mxu0
    %v869 = vadd.f32 0.0, %v868
    %v870 = vpop.f32.mrb[0].mxu0
    %871 = vdwg.mxu0
    %v872 = vadd.f32 %v866, %v869
    %v873 = vrot.slane %v872, 4
    %v874 = vadd.f32 %v872, %v873
    %v875 = vrot.slane %v874, 2
    %v876 = vadd.f32 %v874, %v875
    %v877 = vrot.slane %v876, 1
    %v878 = vadd.f32 %v876, %v877
    %v879 = vmul.f32 %v878, 0.0625
    %v880 = vsub.f32 %v866, %v879
    %v881 = vsub.f32 %v869, %v879
    %v882 = vmul.f32 %v880, %v880
    %v883 = vmul.f32 %v881, %v881
    %v884 = vadd.f32 %v882, %v883
    %v885 = vrot.slane %v884, 4
    %v886 = vadd.f32 %v884, %v885
    %v887 = vrot.slane %v886, 2
    %v888 = vadd.f32 %v886, %v887
    %v889 = vrot.slane %v888, 1
    %v890 = vadd.f32 %v888, %v889
    %v891 = vmul.f32 %v890, 0.0625
    %v892 = vadd.f32 %v891, 1e-05
    %v893 = vrsqrt.pop %v892
    %v894 = vmul.f32 %v880, %v893
    %v895 = vmul.f32 %v881, %v893
    %v896 = vmax.f32 %v894, 0.0
    %v897 = vmax.f32 %v895, 0.0
    %v898 = vpack.c.bf16 %v897, %v896
    %s899 = scalar_lea.vmem [#allocation11], 128
    %v900 = vld [vmem:[%s899] sm:$0xf]
    %v901 = vld [vmem:[%s899 + $0x4] sm:$0xf]
    %v902 = vld [vmem:[%s899 + $0x8] sm:$0xf]
    %v903 = vld [vmem:[%s899 + $0xc] sm:$0xf]
    %v904 = vld [vmem:[%s899 + $0x10] sm:$0xf]
    %v905 = vld [vmem:[%s899 + $0x14] sm:$0xf]
    %v906 = vld [vmem:[%s899 + $0x18] sm:$0xf]
    %v907 = vld [vmem:[%s899 + $0x1c] sm:$0xf]
    %v908 = vld [vmem:[%s899 + $0x20] sm:$0xf]
    %v909 = vld [vmem:[%s899 + $0x24] sm:$0xf]
    %v910 = vld [vmem:[%s899 + $0x28] sm:$0xf]
    %v911 = vld [vmem:[%s899 + $0x2c] sm:$0xf]
    %v912 = vld [vmem:[%s899 + $0x30] sm:$0xf]
    %v913 = vld [vmem:[%s899 + $0x34] sm:$0xf]
    %v914 = vld [vmem:[%s899 + $0x38] sm:$0xf]
    %v915 = vld [vmem:[%s899 + $0x3c] sm:$0xf]
    %v932 = vunpack.c.l.b16 %v900
    %v933 = vunpack.c.l.b16 %v901
    %v934 = vunpack.c.l.b16 %v902
    %v935 = vunpack.c.l.b16 %v903
    %v936 = vunpack.c.l.b16 %v904
    %v937 = vunpack.c.l.b16 %v905
    %v938 = vunpack.c.l.b16 %v906
    %v939 = vunpack.c.l.b16 %v907
    %v940 = vunpack.c.l.b16 %v908
    %v941 = vunpack.c.l.b16 %v909
    %v942 = vunpack.c.l.b16 %v910
    %v943 = vunpack.c.l.b16 %v911
    %v944 = vunpack.c.l.b16 %v912
    %v945 = vunpack.c.l.b16 %v913
    %v946 = vunpack.c.l.b16 %v914
    %v947 = vunpack.c.l.b16 %v915
    %v948 = vpack.c.b16 %v933, %v932
    %v949 = vpack.c.b16 %v935, %v934
    %v950 = vpack.c.b16 %v937, %v936
    %v951 = vpack.c.b16 %v939, %v938
    %v952 = vpack.c.b16 %v941, %v940
    %v953 = vpack.c.b16 %v943, %v942
    %v954 = vpack.c.b16 %v945, %v944
    %v955 = vpack.c.b16 %v947, %v946
    %964 = vmatprep.subr.bf16.mxu0 0
    %965 = vmatpush1.bf16.msra.mxu0 %v948
    %966 = vmatprep.subr.bf16.mxu0 0
    %967 = vmatpush1.bf16.msra.mxu0 %v949
    %968 = vmatprep.subr.bf16.mxu0 0
    %969 = vmatpush1.bf16.msra.mxu0 %v950
    %970 = vmatprep.subr.bf16.mxu0 0
    %971 = vmatpush1.bf16.msra.mxu0 %v951
    %972 = vmatprep.subr.bf16.mxu0 0
    %973 = vmatpush1.bf16.msra.mxu0 %v952
    %974 = vmatprep.subr.bf16.mxu0 0
    %975 = vmatpush1.bf16.msra.mxu0 %v953
    %976 = vmatprep.subr.bf16.mxu0 0
    %977 = vmatpush1.bf16.msra.mxu0 %v954
    %978 = vmatprep.subr.bf16.mxu0 0
    %979 = vmatpush1.bf16.msra.mxu0 %v955
    %980 = vmatprep.subr.bf16.mxu0 0
    %981 = vmatpush1.bf16.msra.mxu0 0
    %982 = vmatprep.subr.bf16.mxu0 0
    %983 = vmatpush1.bf16.msra.mxu0 0
    %984 = vmatprep.subr.bf16.mxu0 0
    %985 = vmatpush1.bf16.msra.mxu0 0
    %986 = vmatprep.subr.bf16.mxu0 0
    %987 = vmatpush1.bf16.msra.mxu0 0
    %988 = vmatprep.subr.bf16.mxu0 0
    %989 = vmatpush1.bf16.msra.mxu0 0
    %990 = vmatprep.subr.bf16.mxu0 0
    %991 = vmatpush1.bf16.msra.mxu0 0
    %992 = vmatprep.subr.bf16.mxu0 0
    %993 = vmatpush1.bf16.msra.mxu0 0
    %994 = vmatprep.subr.bf16.mxu0 0
    %995 = vmatpush1.bf16.msra.mxu0 0
    %996 = vmatprep.mubr.bf16.mxu0 0
    %997 = vmatmul.mubr.bf16.gmra.mrb[0].mxu0 %v898
    %v998 = vpop.f32.mrb[0].mxu0
    %v999 = vadd.f32 %v733, %v998
    %v1000 = vpop.f32.mrb[0].mxu0
    %v1001 = vpop.f32.mrb[0].mxu0
    %v1002 = vadd.f32 %v736, %v1001
    %v1003 = vpop.f32.mrb[0].mxu0
    %1004 = vdwg.mxu0
    %v1005 = vadd.f32 %v999, %v1002
    %v1006 = vrot.slane %v1005, 4
    %v1007 = vadd.f32 %v1005, %v1006
    %v1008 = vrot.slane %v1007, 2
    %v1009 = vadd.f32 %v1007, %v1008
    %v1010 = vrot.slane %v1009, 1
    %v1011 = vadd.f32 %v1009, %v1010
    %v1012 = vmul.f32 %v1011, 0.0625
    %v1013 = vsub.f32 %v999, %v1012
    %v1014 = vsub.f32 %v1002, %v1012
    %v1015 = vmul.f32 %v1013, %v1013
    %v1016 = vmul.f32 %v1014, %v1014
    %v1017 = vadd.f32 %v1015, %v1016
    %v1018 = vrot.slane %v1017, 4
    %v1019 = vadd.f32 %v1017, %v1018
    %v1020 = vrot.slane %v1019, 2
    %v1021 = vadd.f32 %v1019, %v1020
    %v1022 = vrot.slane %v1021, 1
    %v1023 = vadd.f32 %v1021, %v1022
    %v1024 = vmul.f32 %v1023, 0.0625
    %v1025 = vadd.f32 %v1024, 1e-05
    %v1026 = vrsqrt.pop %v1025
    %v1027 = vmul.f32 %v1013, %v1026
    %v1028 = vmul.f32 %v1014, %v1026
    %v1029 = vmax.f32 %v1027, 0.0
    %v1030 = vmax.f32 %v1028, 0.0
    %v1031 = vpack.c.bf16 %v1030, %v1029
    %s1032 = scalar_lea.vmem [#allocation9], 192
    %v1033 = vld [vmem:[%s1032] sm:$0xf]
    %v1034 = vld [vmem:[%s1032 + $0x4] sm:$0xf]
    %v1035 = vld [vmem:[%s1032 + $0x8] sm:$0xf]
    %v1036 = vld [vmem:[%s1032 + $0xc] sm:$0xf]
    %v1037 = vld [vmem:[%s1032 + $0x10] sm:$0xf]
    %v1038 = vld [vmem:[%s1032 + $0x14] sm:$0xf]
    %v1039 = vld [vmem:[%s1032 + $0x18] sm:$0xf]
    %v1040 = vld [vmem:[%s1032 + $0x1c] sm:$0xf]
    %v1041 = vld [vmem:[%s1032 + $0x20] sm:$0xf]
    %v1042 = vld [vmem:[%s1032 + $0x24] sm:$0xf]
    %v1043 = vld [vmem:[%s1032 + $0x28] sm:$0xf]
    %v1044 = vld [vmem:[%s1032 + $0x2c] sm:$0xf]
    %v1045 = vld [vmem:[%s1032 + $0x30] sm:$0xf]
    %v1046 = vld [vmem:[%s1032 + $0x34] sm:$0xf]
    %v1047 = vld [vmem:[%s1032 + $0x38] sm:$0xf]
    %v1048 = vld [vmem:[%s1032 + $0x3c] sm:$0xf]
    %v1065 = vunpack.c.l.b16 %v1033
    %v1066 = vunpack.c.l.b16 %v1034
    %v1067 = vunpack.c.l.b16 %v1035
    %v1068 = vunpack.c.l.b16 %v1036
    %v1069 = vunpack.c.l.b16 %v1037
    %v1070 = vunpack.c.l.b16 %v1038
    %v1071 = vunpack.c.l.b16 %v1039
    %v1072 = vunpack.c.l.b16 %v1040
    %v1073 = vunpack.c.l.b16 %v1041
    %v1074 = vunpack.c.l.b16 %v1042
    %v1075 = vunpack.c.l.b16 %v1043
    %v1076 = vunpack.c.l.b16 %v1044
    %v1077 = vunpack.c.l.b16 %v1045
    %v1078 = vunpack.c.l.b16 %v1046
    %v1079 = vunpack.c.l.b16 %v1047
    %v1080 = vunpack.c.l.b16 %v1048
    %v1081 = vpack.c.b16 %v1066, %v1065
    %v1082 = vpack.c.b16 %v1068, %v1067
    %v1083 = vpack.c.b16 %v1070, %v1069
    %v1084 = vpack.c.b16 %v1072, %v1071
    %v1085 = vpack.c.b16 %v1074, %v1073
    %v1086 = vpack.c.b16 %v1076, %v1075
    %v1087 = vpack.c.b16 %v1078, %v1077
    %v1088 = vpack.c.b16 %v1080, %v1079
    %1097 = vmatprep.subr.bf16.mxu0 0
    %1098 = vmatpush1.bf16.msra.mxu0 %v1081
    %1099 = vmatprep.subr.bf16.mxu0 0
    %1100 = vmatpush1.bf16.msra.mxu0 %v1082
    %1101 = vmatprep.subr.bf16.mxu0 0
    %1102 = vmatpush1.bf16.msra.mxu0 %v1083
    %1103 = vmatprep.subr.bf16.mxu0 0
    %1104 = vmatpush1.bf16.msra.mxu0 %v1084
    %1105 = vmatprep.subr.bf16.mxu0 0
    %1106 = vmatpush1.bf16.msra.mxu0 %v1085
    %1107 = vmatprep.subr.bf16.mxu0 0
    %1108 = vmatpush1.bf16.msra.mxu0 %v1086
    %1109 = vmatprep.subr.bf16.mxu0 0
    %1110 = vmatpush1.bf16.msra.mxu0 %v1087
    %1111 = vmatprep.subr.bf16.mxu0 0
    %1112 = vmatpush1.bf16.msra.mxu0 %v1088
    %1113 = vmatprep.subr.bf16.mxu0 0
    %1114 = vmatpush1.bf16.msra.mxu0 0
    %1115 = vmatprep.subr.bf16.mxu0 0
    %1116 = vmatpush1.bf16.msra.mxu0 0
    %1117 = vmatprep.subr.bf16.mxu0 0
    %1118 = vmatpush1.bf16.msra.mxu0 0
    %1119 = vmatprep.subr.bf16.mxu0 0
    %1120 = vmatpush1.bf16.msra.mxu0 0
    %1121 = vmatprep.subr.bf16.mxu0 0
    %1122 = vmatpush1.bf16.msra.mxu0 0
    %1123 = vmatprep.subr.bf16.mxu0 0
    %1124 = vmatpush1.bf16.msra.mxu0 0
    %1125 = vmatprep.subr.bf16.mxu0 0
    %1126 = vmatpush1.bf16.msra.mxu0 0
    %1127 = vmatprep.subr.bf16.mxu0 0
    %1128 = vmatpush1.bf16.msra.mxu0 0
    %1129 = vmatprep.mubr.bf16.mxu0 0
    %1130 = vmatmul.mubr.bf16.gmra.mrb[0].mxu0 %v1031
    %v1131 = vpop.f32.mrb[0].mxu0
    %v1132 = vadd.f32 0.0, %v1131
    %v1133 = vpop.f32.mrb[0].mxu0
    %v1134 = vpop.f32.mrb[0].mxu0
    %v1135 = vadd.f32 0.0, %v1134
    %v1136 = vpop.f32.mrb[0].mxu0
    %1137 = vdwg.mxu0
    %v1138 = vadd.f32 %v1132, %v1135
    %v1139 = vrot.slane %v1138, 4
    %v1140 = vadd.f32 %v1138, %v1139
    %v1141 = vrot.slane %v1140, 2
    %v1142 = vadd.f32 %v1140, %v1141
    %v1143 = vrot.slane %v1142, 1
    %v1144 = vadd.f32 %v1142, %v1143
    %v1145 = vmul.f32 %v1144, 0.0625
    %v1146 = vsub.f32 %v1132, %v1145
    %v1147 = vsub.f32 %v1135, %v1145
    %v1148 = vmul.f32 %v1146, %v1146
    %v1149 = vmul.f32 %v1147, %v1147
    %v1150 = vadd.f32 %v1148, %v1149
    %v1151 = vrot.slane %v1150, 4
    %v1152 = vadd.f32 %v1150, %v1151
    %v1153 = vrot.slane %v1152, 2
    %v1154 = vadd.f32 %v1152, %v1153
    %v1155 = vrot.slane %v1154, 1
    %v1156 = vadd.f32 %v1154, %v1155
    %v1157 = vmul.f32 %v1156, 0.0625
    %v1158 = vadd.f32 %v1157, 1e-05
    %v1159 = vrsqrt.pop %v1158
    %v1160 = vmul.f32 %v1146, %v1159
    %v1161 = vmul.f32 %v1147, %v1159
    %v1162 = vmax.f32 %v1160, 0.0
    %v1163 = vmax.f32 %v1161, 0.0
    %v1164 = vpack.c.bf16 %v1163, %v1162
    %s1165 = scalar_lea.vmem [#allocation11], 192
    %v1166 = vld [vmem:[%s1165] sm:$0xf]
    %v1167 = vld [vmem:[%s1165 + $0x4] sm:$0xf]
    %v1168 = vld [vmem:[%s1165 + $0x8] sm:$0xf]
    %v1169 = vld [vmem:[%s1165 + $0xc] sm:$0xf]
    %v1170 = vld [vmem:[%s1165 + $0x10] sm:$0xf]
    %v1171 = vld [vmem:[%s1165 + $0x14] sm:$0xf]
    %v1172 = vld [vmem:[%s1165 + $0x18] sm:$0xf]
    %v1173 = vld [vmem:[%s1165 + $0x1c] sm:$0xf]
    %v1174 = vld [vmem:[%s1165 + $0x20] sm:$0xf]
    %v1175 = vld [vmem:[%s1165 + $0x24] sm:$0xf]
    %v1176 = vld [vmem:[%s1165 + $0x28] sm:$0xf]
    %v1177 = vld [vmem:[%s1165 + $0x2c] sm:$0xf]
    %v1178 = vld [vmem:[%s1165 + $0x30] sm:$0xf]
    %v1179 = vld [vmem:[%s1165 + $0x34] sm:$0xf]
    %v1180 = vld [vmem:[%s1165 + $0x38] sm:$0xf]
    %v1181 = vld [vmem:[%s1165 + $0x3c] sm:$0xf]
    %v1198 = vunpack.c.l.b16 %v1166
    %v1199 = vunpack.c.l.b16 %v1167
    %v1200 = vunpack.c.l.b16 %v1168
    %v1201 = vunpack.c.l.b16 %v1169
    %v1202 = vunpack.c.l.b16 %v1170
    %v1203 = vunpack.c.l.b16 %v1171
    %v1204 = vunpack.c.l.b16 %v1172
    %v1205 = vunpack.c.l.b16 %v1173
    %v1206 = vunpack.c.l.b16 %v1174
    %v1207 = vunpack.c.l.b16 %v1175
    %v1208 = vunpack.c.l.b16 %v1176
    %v1209 = vunpack.c.l.b16 %v1177
    %v1210 = vunpack.c.l.b16 %v1178
    %v1211 = vunpack.c.l.b16 %v1179
    %v1212 = vunpack.c.l.b16 %v1180
    %v1213 = vunpack.c.l.b16 %v1181
    %v1214 = vpack.c.b16 %v1199, %v1198
    %v1215 = vpack.c.b16 %v1201, %v1200
    %v1216 = vpack.c.b16 %v1203, %v1202
    %v1217 = vpack.c.b16 %v1205, %v1204
    %v1218 = vpack.c.b16 %v1207, %v1206
    %v1219 = vpack.c.b16 %v1209, %v1208
    %v1220 = vpack.c.b16 %v1211, %v1210
    %v1221 = vpack.c.b16 %v1213, %v1212
    %1230 = vmatprep.subr.bf16.mxu0 0
    %1231 = vmatpush1.bf16.msra.mxu0 %v1214
    %1232 = vmatprep.subr.bf16.mxu0 0
    %1233 = vmatpush1.bf16.msra.mxu0 %v1215
    %1234 = vmatprep.subr.bf16.mxu0 0
    %1235 = vmatpush1.bf16.msra.mxu0 %v1216
    %1236 = vmatprep.subr.bf16.mxu0 0
    %1237 = vmatpush1.bf16.msra.mxu0 %v1217
    %1238 = vmatprep.subr.bf16.mxu0 0
    %1239 = vmatpush1.bf16.msra.mxu0 %v1218
    %1240 = vmatprep.subr.bf16.mxu0 0
    %1241 = vmatpush1.bf16.msra.mxu0 %v1219
    %1242 = vmatprep.subr.bf16.mxu0 0
    %1243 = vmatpush1.bf16.msra.mxu0 %v1220
    %1244 = vmatprep.subr.bf16.mxu0 0
    %1245 = vmatpush1.bf16.msra.mxu0 %v1221
    %1246 = vmatprep.subr.bf16.mxu0 0
    %1247 = vmatpush1.bf16.msra.mxu0 0
    %1248 = vmatprep.subr.bf16.mxu0 0
    %1249 = vmatpush1.bf16.msra.mxu0 0
    %1250 = vmatprep.subr.bf16.mxu0 0
    %1251 = vmatpush1.bf16.msra.mxu0 0
    %1252 = vmatprep.subr.bf16.mxu0 0
    %1253 = vmatpush1.bf16.msra.mxu0 0
    %1254 = vmatprep.subr.bf16.mxu0 0
    %1255 = vmatpush1.bf16.msra.mxu0 0
    %1256 = vmatprep.subr.bf16.mxu0 0
    %1257 = vmatpush1.bf16.msra.mxu0 0
    %1258 = vmatprep.subr.bf16.mxu0 0
    %1259 = vmatpush1.bf16.msra.mxu0 0
    %1260 = vmatprep.subr.bf16.mxu0 0
    %1261 = vmatpush1.bf16.msra.mxu0 0
    %1262 = vmatprep.mubr.bf16.mxu0 0
    %1263 = vmatmul.mubr.bf16.gmra.mrb[0].mxu0 %v1164
    %v1264 = vpop.f32.mrb[0].mxu0
    %v1265 = vadd.f32 %v999, %v1264
    %v1266 = vpop.f32.mrb[0].mxu0
    %v1267 = vpop.f32.mrb[0].mxu0
    %v1268 = vadd.f32 %v1002, %v1267
    %v1269 = vpop.f32.mrb[0].mxu0
    %1270 = vdwg.mxu0
    %1271 = vst [vmem:[#allocation2] sm:$0xff] %v1265
    %1272 = vst [vmem:[#allocation2 + $0x8] sm:$0xff] %v1268
    // Predicated region
    $region50: #{tpu_custom_call.1} parent=1 // pred_check
      %p1273 = pneg %p93
    $region51: #{tpu_custom_call.1} parent=1 // pred_check_branch
      %1275 = sbr.rel (%p1273) target = $region53
    $region52: #{tpu_custom_call.1} parent=1 // pred_region
      %v1276 = vld [vmem:[#allocation2] sm:$0xff]
      %v1277 = vld [vmem:[#allocation2 + $0x8] sm:$0xff]
      %v1278 = vadd.f32 %v1276, %v1277
      %v1279 = vrot.slane %v1278, 4
      %v1280 = vadd.f32 %v1278, %v1279
      %v1281 = vrot.slane %v1280, 2
      %v1282 = vadd.f32 %v1280, %v1281
      %v1283 = vrot.slane %v1282, 1
      %v1284 = vadd.f32 %v1282, %v1283
      %v1285 = vmul.f32 %v1284, 0.0625
      %v1286 = vsub.f32 %v1276, %v1285
      %v1287 = vsub.f32 %v1277, %v1285
      %v1288 = vmul.f32 %v1286, %v1286
      %v1289 = vmul.f32 %v1287, %v1287
      %v1290 = vadd.f32 %v1288, %v1289
      %v1291 = vrot.slane %v1290, 4
      %v1292 = vadd.f32 %v1290, %v1291
      %v1293 = vrot.slane %v1292, 2
      %v1294 = vadd.f32 %v1292, %v1293
      %v1295 = vrot.slane %v1294, 1
      %v1296 = vadd.f32 %v1294, %v1295
      %v1297 = vmul.f32 %v1296, 0.0625
      %v1298 = vadd.f32 %v1297, 1e-05
      %v1299 = vrsqrt.pop %v1298
      %v1300 = vmul.f32 %v1286, %v1299
      %v1301 = vmul.f32 %v1287, %v1299
      %v1302 = vmax.f32 %v1300, 0.0
      %v1303 = vmax.f32 %v1301, 0.0
      %v1304 = vpack.c.bf16 %v1303, %v1302
      %v1305 = vld [vmem:[#allocation8] sm:$0xf]
      %v1306 = vld [vmem:[#allocation8 + $0x4] sm:$0xf]
      %v1307 = vld [vmem:[#allocation8 + $0x8] sm:$0xf]
      %v1308 = vld [vmem:[#allocation8 + $0xc] sm:$0xf]
      %v1309 = vld [vmem:[#allocation8 + $0x10] sm:$0xf]
      %v1310 = vld [vmem:[#allocation8 + $0x14] sm:$0xf]
      %v1311 = vld [vmem:[#allocation8 + $0x18] sm:$0xf]
      %v1312 = vld [vmem:[#allocation8 + $0x1c] sm:$0xf]
      %v1313 = vld [vmem:[#allocation8 + $0x20] sm:$0xf]
      %v1314 = vld [vmem:[#allocation8 + $0x24] sm:$0xf]
      %v1315 = vld [vmem:[#allocation8 + $0x28] sm:$0xf]
      %v1316 = vld [vmem:[#allocation8 + $0x2c] sm:$0xf]
      %v1317 = vld [vmem:[#allocation8 + $0x30] sm:$0xf]
      %v1318 = vld [vmem:[#allocation8 + $0x34] sm:$0xf]
      %v1319 = vld [vmem:[#allocation8 + $0x38] sm:$0xf]
      %v1320 = vld [vmem:[#allocation8 + $0x3c] sm:$0xf]
      %v1321 = vld [vmem:[%s3] sm:$0x1]
      %v1323 = vlaneseq
      %v1324 = vshrl.u32 %v1323, 7
      %v1325 = vsub.s32 0, %v1324
      %v1326 = vrot.slane %v1321, %v1325
      %v1344 = vunpack.c.l.b16 %v1305
      %v1345 = vunpack.c.l.b16 %v1306
      %v1346 = vunpack.c.l.b16 %v1307
      %v1347 = vunpack.c.l.b16 %v1308
      %v1348 = vunpack.c.l.b16 %v1309
      %v1349 = vunpack.c.l.b16 %v1310
      %v1350 = vunpack.c.l.b16 %v1311
      %v1351 = vunpack.c.l.b16 %v1312
      %v1352 = vunpack.c.l.b16 %v1313
      %v1353 = vunpack.c.l.b16 %v1314
      %v1354 = vunpack.c.l.b16 %v1315
      %v1355 = vunpack.c.l.b16 %v1316
      %v1356 = vunpack.c.l.b16 %v1317
      %v1357 = vunpack.c.l.b16 %v1318
      %v1358 = vunpack.c.l.b16 %v1319
      %v1359 = vunpack.c.l.b16 %v1320
      %v1360 = vpack.c.b16 %v1345, %v1344
      %v1361 = vpack.c.b16 %v1347, %v1346
      %v1362 = vpack.c.b16 %v1349, %v1348
      %v1363 = vpack.c.b16 %v1351, %v1350
      %v1364 = vpack.c.b16 %v1353, %v1352
      %v1365 = vpack.c.b16 %v1355, %v1354
      %v1366 = vpack.c.b16 %v1357, %v1356
      %v1367 = vpack.c.b16 %v1359, %v1358
      %1376 = vmatprep.subr.bf16.mxu0 0
      %1377 = vmatpush1.bf16.msra.mxu0 %v1360
      %1378 = vmatprep.subr.bf16.mxu0 0
      %1379 = vmatpush1.bf16.msra.mxu0 %v1361
      %1380 = vmatprep.subr.bf16.mxu0 0
      %1381 = vmatpush1.bf16.msra.mxu0 %v1362
      %1382 = vmatprep.subr.bf16.mxu0 0
      %1383 = vmatpush1.bf16.msra.mxu0 %v1363
      %1384 = vmatprep.subr.bf16.mxu0 0
      %1385 = vmatpush1.bf16.msra.mxu0 %v1364
      %1386 = vmatprep.subr.bf16.mxu0 0
      %1387 = vmatpush1.bf16.msra.mxu0 %v1365
      %1388 = vmatprep.subr.bf16.mxu0 0
      %1389 = vmatpush1.bf16.msra.mxu0 %v1366
      %1390 = vmatprep.subr.bf16.mxu0 0
      %1391 = vmatpush1.bf16.msra.mxu0 %v1367
      %1392 = vmatprep.subr.bf16.mxu0 0
      %1393 = vmatpush1.bf16.msra.mxu0 0
      %1394 = vmatprep.subr.bf16.mxu0 0
      %1395 = vmatpush1.bf16.msra.mxu0 0
      %1396 = vmatprep.subr.bf16.mxu0 0
      %1397 = vmatpush1.bf16.msra.mxu0 0
      %1398 = vmatprep.subr.bf16.mxu0 0
      %1399 = vmatpush1.bf16.msra.mxu0 0
      %1400 = vmatprep.subr.bf16.mxu0 0
      %1401 = vmatpush1.bf16.msra.mxu0 0
      %1402 = vmatprep.subr.bf16.mxu0 0
      %1403 = vmatpush1.bf16.msra.mxu0 0
      %1404 = vmatprep.subr.bf16.mxu0 0
      %1405 = vmatpush1.bf16.msra.mxu0 0
      %1406 = vmatprep.subr.bf16.mxu0 0
      %1407 = vmatpush1.bf16.msra.mxu0 0
      %1408 = vmatprep.mubr.bf16.mxu0 0
      %1409 = vmatmul.mubr.bf16.gmra.mrb[0].mxu0 %v1304
      %v1410 = vpop.f32.mrb[0].mxu0
      %v1411 = vadd.f32 %v1326, %v1410
      %v1412 = vpop.f32.mrb[0].mxu0
      %v1413 = vpop.f32.mrb[0].mxu0
      %v1414 = vadd.f32 %v1326, %v1413
      %v1415 = vpop.f32.mrb[0].mxu0
      %1416 = vdwg.mxu0
      %1417 = vst [vmem:[#allocation12] sm:$0xff] %v1411
      %1418 = vst [vmem:[#allocation12 + $0x8] sm:$0xff] %v1414
    $region53: #{tpu_custom_call.1} parent=1 // pred_fallthru
      _
    // Predicated region
    $region54: #{tpu_custom_call.1} parent=1 // pred_check
      _
    $region55: #{tpu_custom_call.1} parent=1 // pred_check_branch
      %1420 = sbr.rel (0) target = $region57
    $region56: #{tpu_custom_call.1} parent=1 // pred_region
      %s1422 = ssub.s32 256, 256
      %1423 = vsyncadd [#allocation5], %s1422
      %s1424 = sshll.u32 [#allocation12], 4
      %s1425 = int_to_ptr.vmem [resolvable:$true] %s1424
      %1430 = dma.vmem_to_hbm [thread:$0]  %s1425, 256, %s6, [#allocation5], 128, 128, 8
    $region57: #{tpu_custom_call.1} parent=1 // pred_fallthru
      _
    // Predicated region
    $region58: #{tpu_custom_call.1} parent=1 // pred_check
      _
    $region59: #{tpu_custom_call.1} parent=1 // pred_check_branch
      %1432 = sbr.rel (0) target = $region61
    $region60: #{tpu_custom_call.1} parent=1 // pred_region
      %1433 = dma.done [#allocation5], 256
    $region61: #{tpu_custom_call.1} parent=1 // pred_fallthru
      _
    %1434 = vsyncpa [#allocation4], 1
    %1435 = vsyncpa [#allocation7], 1
    %1436 = vsyncpa [#allocation10], 1
    %1437 = vsyncpa [#allocation5], 1

</llo_original>
